<compile_context>
chip_gen: v5e
topology: v5e:2x2
jax: 0.10.0
libtpu: 0.0.40
codegen_flags: <defaults>
</compile_context>

<pallas_src>
import jax
import jax.numpy as jnp
from jax.experimental import pallas as pl
from jax.experimental.pallas import tpu as pltpu

# ---------------- hyperparameters (small, consistent with MAGNN_lp_layer) ----------------
IN_DIM = 32            # in_dim  (== out_dim of each metapath-specific layer)
OUT_DIM = 16           # out_dim of MAGNN_lp_layer
NUM_HEADS = 4
ATTN_VEC_DIM = 16
NUM_METAPATHS = (2, 2)     # num_metapaths_list = [user, item]
LEAKY_ALPHA = 0.01
HID = NUM_HEADS * IN_DIM   # GRU hidden = num_heads * out_dim = 128
M_TOTAL = sum(NUM_METAPATHS)

# graph / minibatch sizes
N_FEAT_NODES = 24   # rows of `features`
E_EDGES = 16        # metapath instances (edges) per metapath graph
L_PATH = 3          # metapath length
N_LOCAL = 8         # nodes in each (minibatch) metapath graph
T_TARGET = 8        # number of target nodes per ctr-ntype layer

MP_PER_STEP = 2                      # metapaths per grid step
assert M_TOTAL % MP_PER_STEP == 0
GRID_STEPS = M_TOTAL // MP_PER_STEP  # grid=(2,): both v7x TCs busy, half the step overhead
LE = L_PATH * E_EDGES


# ============================== fused Pallas kernel ==============================

def _fused_metapath_kernel(g1h_ref,    # (MP, L*E, NF) bf16  feature-gather one-hot (seq-major)
                           feat_ref,   # (NF, D)       bf16
                           tinc_ref,   # (MP, T, E)    bf16  target-dst incidence
                           wih_ref,    # (MP, D, 3*HID)  bf16  GRU W_ih^T
                           whh_ref,    # (MP, HID, 3*HID) bf16 GRU W_hh^T
                           bih_ref,    # (MP, 1, 3*HID) f32
                           bhh_ref,    # (MP, 1, 3*HID) f32
                           amatf_ref,  # (MP, HID, HID) bf16  amat @ rmat (lane-dense logits)
                           o_ref,      # (MP, T, HID)   f32   elu(metapath_out[target_idx])
                           gi_ref):    # VMEM scratch (L*E, 3*HID) f32
    f32, bf16 = jnp.float32, jnp.bfloat16

    # --- feature gather (== F.embedding) batched over both metapaths of this step ------
    g1h = g1h_ref[...].reshape(MP_PER_STEP * LE, N_FEAT_NODES)
    edata_all = jnp.dot(g1h, feat_ref[...], preferred_element_type=f32)       # (MP*L*E, D)

    for mi in range(MP_PER_STEP):
        edata = edata_all[mi * LE:(mi + 1) * LE, :]                           # (L*E, D)

        # --- GRU input projection hoisted out of the recurrence; stage in VMEM scratch --
        gi_ref[...] = (jnp.dot(edata.astype(bf16), wih_ref[mi],
                               preferred_element_type=f32) + bih_ref[mi])      # (L*E, 3*HID)

        whh = whh_ref[mi]
        bhh = bhh_ref[mi]
        h = jnp.zeros((E_EDGES, HID), dtype=f32)
        for t in range(L_PATH):                 # static, unrolled; gate order [r, z, n]
            gi = gi_ref[t * E_EDGES:(t + 1) * E_EDGES, :]
            gh = jnp.dot(h.astype(bf16), whh, preferred_element_type=f32) + bhh
            r = jax.nn.sigmoid(gi[:, :HID] + gh[:, :HID])
            z = jax.nn.sigmoid(gi[:, HID:2 * HID] + gh[:, HID:2 * HID])
            n = jnp.tanh(gi[:, 2 * HID:] + r * gh[:, 2 * HID:])
            h = (1.0 - z) * n + z * h                                          # (E, HID) f32

        # --- per-head attention logits, lane-dense (head logit replicated over its lanes)
        a = jnp.dot(h.astype(bf16), amatf_ref[mi], preferred_element_type=f32)  # (E, HID)
        a = jnp.where(a >= 0.0, a, LEAKY_ALPHA * a)                            # LeakyReLU

        # --- edge_softmax: global shift is exact (softmax is shift-invariant per
        #     destination group) and overflow-safe; replaces per-dst max + d1ht matmul.
        p = jnp.exp(a - jnp.max(a))                                            # (E, HID)

        # --- softmax-normalized aggregation + ret[target_idx], folded into one
        #     (T, E) target-destination incidence matmul pair.
        tinc = tinc_ref[mi]                                                    # (T, E)
        numer = jnp.dot(tinc, (h * p).astype(bf16), preferred_element_type=f32)  # (T, HID)
        denom = jnp.dot(tinc, p.astype(bf16), preferred_element_type=f32)        # (T, HID)
        has_edge = denom > 0.0
        inv = pl.reciprocal(jnp.where(has_edge, denom, 1.0), approx=True)
        out = jnp.where(has_edge, numer * inv, 0.0)                            # (T, HID)
        # ELU (alpha=1), matching F.elu
        o_ref[mi] = jnp.where(out > 0.0, out, jnp.exp(jnp.minimum(out, 0.0)) - 1.0)


def _cost_estimate():
    per_mp_flops = (
        2 * LE * N_FEAT_NODES * IN_DIM            # feature gather
        + 2 * LE * IN_DIM * 3 * HID               # GRU input projection
        + L_PATH * 2 * E_EDGES * HID * 3 * HID    # GRU recurrence h @ W_hh
        + 2 * E_EDGES * HID * HID                 # attention logits
        + 2 * 2 * T_TARGET * E_EDGES * HID        # numerator + denominator
    )
    per_mp_trans = (
        L_PATH * 3 * E_EDGES * HID                # 2x sigmoid + tanh per GRU step
        + E_EDGES * HID                           # exp (softmax)
        + 2 * T_TARGET * HID                      # reciprocal + ELU exp
    )
    bytes_in = 2 * (M_TOTAL * LE * N_FEAT_NODES + N_FEAT_NODES * IN_DIM
                    + M_TOTAL * T_TARGET * E_EDGES + M_TOTAL * IN_DIM * 3 * HID
                    + M_TOTAL * HID * 3 * HID + M_TOTAL * HID * HID) \
        + 4 * (2 * M_TOTAL * 3 * HID)
    bytes_out = 4 * M_TOTAL * T_TARGET * HID
    return pl.CostEstimate(flops=M_TOTAL * per_mp_flops,
                           transcendentals=M_TOTAL * per_mp_trans,
                           bytes_accessed=bytes_in + bytes_out)


def fused_metapaths(gather1h, feat_b, tinc, w_ih_t, w_hh_t, b_ih, b_hh, amat_full):
    grid_spec = pltpu.PrefetchScalarGridSpec(
        num_scalar_prefetch=0,
        grid=(GRID_STEPS,),
        in_specs=[
            pl.BlockSpec((MP_PER_STEP, LE, N_FEAT_NODES), lambda g: (g, 0, 0)),
            pl.BlockSpec((N_FEAT_NODES, IN_DIM), lambda g: (0, 0)),
            pl.BlockSpec((MP_PER_STEP, T_TARGET, E_EDGES), lambda g: (g, 0, 0)),
            pl.BlockSpec((MP_PER_STEP, IN_DIM, 3 * HID), lambda g: (g, 0, 0)),
            pl.BlockSpec((MP_PER_STEP, HID, 3 * HID), lambda g: (g, 0, 0)),
            pl.BlockSpec((MP_PER_STEP, 1, 3 * HID), lambda g: (g, 0, 0)),
            pl.BlockSpec((MP_PER_STEP, 1, 3 * HID), lambda g: (g, 0, 0)),
            pl.BlockSpec((MP_PER_STEP, HID, HID), lambda g: (g, 0, 0)),
        ],
        out_specs=pl.BlockSpec((MP_PER_STEP, T_TARGET, HID), lambda g: (g, 0, 0)),
        scratch_shapes=[pltpu.VMEM((LE, 3 * HID), jnp.float32)],
    )
    return pl.pallas_call(
        _fused_metapath_kernel,
        grid_spec=grid_spec,
        out_shape=jax.ShapeDtypeStruct((M_TOTAL, T_TARGET, HID), jnp.float32),
        compiler_params=pltpu.CompilerParams(dimension_semantics=("parallel",)),
        cost_estimate=_cost_estimate(),
    )(gather1h, feat_b, tinc, w_ih_t, w_hh_t, b_ih, b_hh, amat_full)


# ============================== parameter init / packing ==============================

def xavier_normal(key, shape, gain=1.414):
    fan_in = shape[-1]
    fan_out = shape[-2] if len(shape) > 1 else shape[-1]
    std = gain * (2.0 / (fan_in + fan_out)) ** 0.5
    return std * jax.random.normal(key, shape, dtype=jnp.float32)


def gru_init(key, hid, inp):
    k1, k2, k3, k4 = jax.random.split(key, 4)
    bound = 1.0 / (hid ** 0.5)
    u = lambda k, s: jax.random.uniform(k, s, jnp.float32, -bound, bound)
    return dict(w_ih=u(k1, (3 * hid, inp)), w_hh=u(k2, (3 * hid, hid)),
                b_ih=u(k3, (3 * hid,)), b_hh=u(k4, (3 * hid,)))


def init_params(key):
    def nk():
        nonlocal key
        key, sub = jax.random.split(key)
        return sub

    layers = []
    for n_mp in NUM_METAPATHS:
        mps = []
        for _ in range(n_mp):
            mp = gru_init(nk(), HID, IN_DIM)
            mp["attn"] = xavier_normal(nk(), (NUM_HEADS, IN_DIM))   # nn.Parameter (1,H,D)
            mps.append(mp)
        layers.append(dict(
            metapaths=mps,
            fc1_w=xavier_normal(nk(), (ATTN_VEC_DIM, HID)),
            fc1_b=jnp.zeros((ATTN_VEC_DIM,), jnp.float32),
            fc2_w=xavier_normal(nk(), (1, ATTN_VEC_DIM)),
        ))
    return dict(
        user=layers[0], item=layers[1],
        fc_user_w=xavier_normal(nk(), (OUT_DIM, HID)),
        fc_user_b=jnp.zeros((OUT_DIM,), jnp.float32),
        fc_item_w=xavier_normal(nk(), (OUT_DIM, HID)),
        fc_item_b=jnp.zeros((OUT_DIM,), jnp.float32),
    )


def pack_params(params):
    """One-time host-side prep: stack per-metapath weights, transpose, build the
    lane-dense attention matrix amat_full = amat @ rmat, cast matmul operands to bf16."""
    bf16 = jnp.bfloat16
    mps = params["user"]["metapaths"] + params["item"]["metapaths"]
    eye_h = jnp.eye(NUM_HEADS, dtype=jnp.float32)
    rmat = jnp.kron(eye_h, jnp.ones((1, IN_DIM), jnp.float32))          # (H, HID)
    amat_full = []
    for mp in mps:
        # amat[h*D+d, h2] = attn[h, d] if h == h2 else 0  -> per-head dot product via MXU
        amat = (eye_h[:, None, :] * mp["attn"][:, :, None]).reshape(HID, NUM_HEADS)
        amat_full.append(amat @ rmat)                                   # (HID, HID)
    return dict(
        w_ih_t=jnp.stack([mp["w_ih"].T for mp in mps]).astype(bf16),    # (M, D, 3*HID)
        w_hh_t=jnp.stack([mp["w_hh"].T for mp in mps]).astype(bf16),    # (M, HID, 3*HID)
        b_ih=jnp.stack([mp["b_ih"].reshape(1, -1) for mp in mps]),      # (M, 1, 3*HID) f32
        b_hh=jnp.stack([mp["b_hh"].reshape(1, -1) for mp in mps]),      # (M, 1, 3*HID) f32
        amat_full=jnp.stack(amat_full).astype(bf16),                    # (M, HID, HID)
        fc1_w=jnp.stack([params["user"]["fc1_w"], params["item"]["fc1_w"]]),
        fc1_b=jnp.stack([params["user"]["fc1_b"], params["item"]["fc1_b"]]),
        fc2_w=jnp.stack([params["user"]["fc2_w"], params["item"]["fc2_w"]]),
        fc_user_w=params["fc_user_w"], fc_user_b=params["fc_user_b"],
        fc_item_w=params["fc_item_w"], fc_item_b=params["fc_item_b"],
    )


def prepare_graph_inputs(edge_idx_list, dst_list, target_idx_list):
    """Stack per-metapath graph data into kernel-ready dense arrays (one-time per minibatch)."""
    bf16 = jnp.bfloat16
    g1h, tinc = [], []
    for eidx, dst, tid in zip(edge_idx_list, dst_list, target_idx_list):
        idx_lmajor = eidx.T.reshape(-1)     # seq-major rows -> kernel slices gi[t*E:(t+1)*E]
        g1h.append(jax.nn.one_hot(idx_lmajor, N_FEAT_NODES, dtype=jnp.float32))
        # (T, E) target-destination incidence: folds edge_softmax dst-grouping and the
        # final ret[target_idx] selection into one matrix (exact; non-target dsts never
        # influence the output).
        tinc.append((tid[:, None] == dst[None, :]).astype(jnp.float32))
    return jnp.stack(g1h).astype(bf16), jnp.stack(tinc).astype(bf16)


# ============================== forward pass ==============================

def _ctr_combine(mp_out, fc1_w, fc1_b, fc2_w):
    # mp_out: (n_mp, T, HID), already F.elu'd inside the kernel.  Tiny linears stay in XLA.
    fc1 = jnp.tanh(jnp.einsum('mtd,ad->mta', mp_out, fc1_w) + fc1_b)    # (n_mp, T, A)
    fc1_mean = jnp.mean(fc1, axis=1)                                    # (n_mp, A)
    scores = (fc1_mean @ fc2_w.T)[:, 0]                                 # (n_mp,)
    beta = jax.nn.softmax(scores)
    return jnp.sum(beta[:, None, None] * mp_out, axis=0)                # (T, HID)


@jax.jit
def magnn_lp_forward(packed, features, type_mask, gather1h, tinc):
    # type_mask unused for rnn_type='gru' (kept for interface parity with PyTorch)
    del type_mask
    feat_b = features.astype(jnp.bfloat16)
    mp_out = fused_metapaths(gather1h, feat_b, tinc,
                             packed["w_ih_t"], packed["w_hh_t"],
                             packed["b_ih"], packed["b_hh"],
                             packed["amat_full"])                       # (M_total, T, HID)
    n_user = NUM_METAPATHS[0]
    h_user = _ctr_combine(mp_out[:n_user], packed["fc1_w"][0], packed["fc1_b"][0],
                          packed["fc2_w"][0])
    h_item = _ctr_combine(mp_out[n_user:], packed["fc1_w"][1], packed["fc1_b"][1],
                          packed["fc2_w"][1])
    logits_user = h_user @ packed["fc_user_w"].T + packed["fc_user_b"]
    logits_item = h_item @ packed["fc_item_w"].T + packed["fc_item_b"]
    return [logits_user, logits_item], [h_user, h_item]


# ============================== main ==============================

if __name__ == "__main__":
    key = jax.random.PRNGKey(0)
    k_feat, k_param, k_graph = jax.random.split(key, 3)

    features = jax.random.normal(k_feat, (N_FEAT_NODES, IN_DIM), jnp.float32)
    type_mask = jnp.zeros((N_FEAT_NODES,), jnp.int32)
    params = init_params(k_param)
    packed = pack_params(params)      # host-side prep hoisted out of the forward

    edge_idx_list, dst_list, target_idx_list = [], [], []
    gk = k_graph
    for _ in range(M_TOTAL):
        gk, k1, k2, k3 = jax.random.split(gk, 4)
        edge_idx_list.append(jax.random.randint(k1, (E_EDGES, L_PATH), 0, N_FEAT_NODES))
        dst_list.append(jax.random.randint(k2, (E_EDGES,), 0, N_LOCAL))
        target_idx_list.append(jax.random.randint(k3, (T_TARGET,), 0, N_LOCAL))

    gather1h, tinc = prepare_graph_inputs(edge_idx_list, dst_list, target_idx_list)

    logits, hs = magnn_lp_forward(packed, features, type_mask, gather1h, tinc)
    for arr in logits + hs:
        jax.block_until_ready(arr)

    assert logits[0].shape == (T_TARGET, OUT_DIM)
    assert logits[1].shape == (T_TARGET, OUT_DIM)
    assert hs[0].shape == (T_TARGET, HID)
    assert hs[1].shape == (T_TARGET, HID)
    assert all(bool(jnp.all(jnp.isfinite(a))) for a in logits + hs)
    print("KERNEL_OK")
</pallas_src>

<mosaic_0001>
module attributes {stable_mosaic.version = 11 : i64} {
  func.func @_fused_metapath_kernel(%arg0: i32, %arg1: memref<2x48x24xbf16, #tpu.memory_space<vmem>>, %arg2: memref<24x32xbf16, #tpu.memory_space<vmem>>, %arg3: memref<2x8x16xbf16, #tpu.memory_space<vmem>>, %arg4: memref<2x32x384xbf16, #tpu.memory_space<vmem>>, %arg5: memref<2x128x384xbf16, #tpu.memory_space<vmem>>, %arg6: memref<2x1x384xf32, #tpu.memory_space<vmem>>, %arg7: memref<2x1x384xf32, #tpu.memory_space<vmem>>, %arg8: memref<2x128x128xbf16, #tpu.memory_space<vmem>>, %arg9: memref<2x8x128xf32, #tpu.memory_space<vmem>>, %arg10: memref<48x384xf32, #tpu.memory_space<vmem>>) attributes {dimension_semantics = [#tpu.dimension_semantics<parallel>], iteration_bounds = array<i64: 2>, scalar_prefetch = 0 : i64, scratch_operands = 1 : i64, tpu.core_type = #tpu.core_type<tc>, window_params = [{transform_indices = @transform_0, window_bounds = array<i64: 2, 48, 24>}, {pipeline_mode = #tpu.pipeline_mode<synchronous>, transform_indices = @transform_1, window_bounds = array<i64: 24, 32>}, {transform_indices = @transform_2, window_bounds = array<i64: 2, 8, 16>}, {transform_indices = @transform_3, window_bounds = array<i64: 2, 32, 384>}, {transform_indices = @transform_4, window_bounds = array<i64: 2, 128, 384>}, {transform_indices = @transform_5, window_bounds = array<i64: 2, 1, 384>}, {transform_indices = @transform_6, window_bounds = array<i64: 2, 1, 384>}, {transform_indices = @transform_7, window_bounds = array<i64: 2, 128, 128>}, {transform_indices = @transform_8, window_bounds = array<i64: 2, 8, 128>}]} {
    %c0 = arith.constant 0 : index
    %c0_0 = arith.constant 0 : index
    %c0_1 = arith.constant 0 : index
    %0 = vector.load %arg1[%c0, %c0_0, %c0_1] : memref<2x48x24xbf16, #tpu.memory_space<vmem>>, vector<2x48x24xbf16>
    %1 = vector.shape_cast %0 : vector<2x48x24xbf16> to vector<96x24xbf16>
    %c0_2 = arith.constant 0 : index
    %c0_3 = arith.constant 0 : index
    %2 = vector.load %arg2[%c0_2, %c0_3] : memref<24x32xbf16, #tpu.memory_space<vmem>>, vector<24x32xbf16>
    %cst = arith.constant dense<0.000000e+00> : vector<96x32xf32>
    %3 = tpu.matmul %1, %2, %cst {dimension_numbers = #tpu.dot_dimension_numbers<[1], [0], [0], [1], [0, 0, 1, 1], [], []>} : vector<96x24xbf16>, vector<24x32xbf16>, vector<96x32xf32> -> vector<96x32xf32>
    %4 = vector.extract_strided_slice %3 {offsets = [0, 0], sizes = [48, 32], strides = [1, 1]} : vector<96x32xf32> to vector<48x32xf32>
    %5 = arith.truncf %4 : vector<48x32xf32> to vector<48x32xbf16>
    %c0_4 = arith.constant 0 : index
    %c0_5 = arith.constant 0 : index
    %c0_6 = arith.constant 0 : index
    %6 = vector.load %arg4[%c0_4, %c0_5, %c0_6] : memref<2x32x384xbf16, #tpu.memory_space<vmem>>, vector<1x32x384xbf16>
    %7 = vector.shape_cast %6 : vector<1x32x384xbf16> to vector<32x384xbf16>
    %cst_7 = arith.constant dense<0.000000e+00> : vector<48x384xf32>
    %8 = tpu.matmul %5, %7, %cst_7 {dimension_numbers = #tpu.dot_dimension_numbers<[1], [0], [0], [1], [0, 0, 1, 1], [], []>} : vector<48x32xbf16>, vector<32x384xbf16>, vector<48x384xf32> -> vector<48x384xf32>
    %c0_8 = arith.constant 0 : index
    %c0_9 = arith.constant 0 : index
    %c0_10 = arith.constant 0 : index
    %9 = vector.load %arg6[%c0_8, %c0_9, %c0_10] : memref<2x1x384xf32, #tpu.memory_space<vmem>>, vector<1x1x384xf32>
    %10 = vector.shape_cast %9 : vector<1x1x384xf32> to vector<1x384xf32>
    %11 = vector.broadcast %10 : vector<1x384xf32> to vector<48x384xf32>
    %12 = arith.addf %8, %11 : vector<48x384xf32>
    %c0_11 = arith.constant 0 : index
    %c0_12 = arith.constant 0 : index
    %13 = vector.load %arg10[%c0_11, %c0_12] : memref<48x384xf32, #tpu.memory_space<vmem>>, vector<48x384xf32>
    tpu.vector_store %arg10[%c0_11, %c0_12], %12 {strides = array<i32>} : memref<48x384xf32, #tpu.memory_space<vmem>>, vector<48x384xf32>,
    %c0_13 = arith.constant 0 : index
    %c0_14 = arith.constant 0 : index
    %c0_15 = arith.constant 0 : index
    %14 = vector.load %arg5[%c0_13, %c0_14, %c0_15] : memref<2x128x384xbf16, #tpu.memory_space<vmem>>, vector<1x128x384xbf16>
    %15 = vector.shape_cast %14 : vector<1x128x384xbf16> to vector<128x384xbf16>
    %c0_16 = arith.constant 0 : index
    %c0_17 = arith.constant 0 : index
    %c0_18 = arith.constant 0 : index
    %16 = vector.load %arg7[%c0_16, %c0_17, %c0_18] : memref<2x1x384xf32, #tpu.memory_space<vmem>>, vector<1x1x384xf32>
    %17 = vector.shape_cast %16 : vector<1x1x384xf32> to vector<1x384xf32>
    %cst_19 = arith.constant 0.000000e+00 : f32
    %18 = vector.broadcast %cst_19 : f32 to vector<16x128xf32>
    %c0_20 = arith.constant 0 : index
    %c0_21 = arith.constant 0 : index
    %19 = vector.load %arg10[%c0_20, %c0_21] : memref<48x384xf32, #tpu.memory_space<vmem>>, vector<16x384xf32>
    %20 = arith.truncf %18 : vector<16x128xf32> to vector<16x128xbf16>
    %cst_22 = arith.constant dense<0.000000e+00> : vector<16x384xf32>
    %21 = tpu.matmul %20, %15, %cst_22 {dimension_numbers = #tpu.dot_dimension_numbers<[1], [0], [0], [1], [0, 0, 1, 1], [], []>} : vector<16x128xbf16>, vector<128x384xbf16>, vector<16x384xf32> -> vector<16x384xf32>
    %22 = vector.broadcast %17 : vector<1x384xf32> to vector<16x384xf32>
    %23 = arith.addf %21, %22 : vector<16x384xf32>
    %24 = vector.extract_strided_slice %19 {offsets = [0, 0], sizes = [16, 128], strides = [1, 1]} : vector<16x384xf32> to vector<16x128xf32>
    %25 = vector.extract_strided_slice %23 {offsets = [0, 0], sizes = [16, 128], strides = [1, 1]} : vector<16x384xf32> to vector<16x128xf32>
    %26 = arith.addf %24, %25 : vector<16x128xf32>
    %27 = arith.negf %26 : vector<16x128xf32>
    %28 = math.exp %27 : vector<16x128xf32>
    %cst_23 = arith.constant 1.000000e+00 : f32
    %29 = vector.broadcast %cst_23 : f32 to vector<16x128xf32>
    %30 = arith.addf %29, %28 : vector<16x128xf32>
    %31 = arith.divf %29, %30 : vector<16x128xf32>
    %32 = vector.extract_strided_slice %19 {offsets = [0, 128], sizes = [16, 128], strides = [1, 1]} : vector<16x384xf32> to vector<16x128xf32>
    %33 = vector.extract_strided_slice %23 {offsets = [0, 128], sizes = [16, 128], strides = [1, 1]} : vector<16x384xf32> to vector<16x128xf32>
    %34 = arith.addf %32, %33 : vector<16x128xf32>
    %35 = arith.negf %34 : vector<16x128xf32>
    %36 = math.exp %35 : vector<16x128xf32>
    %cst_24 = arith.constant 1.000000e+00 : f32
    %37 = vector.broadcast %cst_24 : f32 to vector<16x128xf32>
    %38 = arith.addf %37, %36 : vector<16x128xf32>
    %39 = arith.divf %37, %38 : vector<16x128xf32>
    %40 = vector.extract_strided_slice %19 {offsets = [0, 256], sizes = [16, 128], strides = [1, 1]} : vector<16x384xf32> to vector<16x128xf32>
    %41 = vector.extract_strided_slice %23 {offsets = [0, 256], sizes = [16, 128], strides = [1, 1]} : vector<16x384xf32> to vector<16x128xf32>
    %42 = arith.mulf %31, %41 : vector<16x128xf32>
    %43 = arith.addf %40, %42 : vector<16x128xf32>
    %44 = math.tanh %43 : vector<16x128xf32>
    %cst_25 = arith.constant 1.000000e+00 : f32
    %45 = vector.broadcast %cst_25 : f32 to vector<16x128xf32>
    %46 = arith.subf %45, %39 : vector<16x128xf32>
    %47 = arith.mulf %46, %44 : vector<16x128xf32>
    %48 = arith.mulf %39, %18 : vector<16x128xf32>
    %49 = arith.addf %47, %48 : vector<16x128xf32>
    %c16 = arith.constant 16 : index
    %c0_26 = arith.constant 0 : index
    %50 = vector.load %arg10[%c16, %c0_26] : memref<48x384xf32, #tpu.memory_space<vmem>>, vector<16x384xf32>
    %51 = arith.truncf %49 : vector<16x128xf32> to vector<16x128xbf16>
    %cst_27 = arith.constant dense<0.000000e+00> : vector<16x384xf32>
    %52 = tpu.matmul %51, %15, %cst_27 {dimension_numbers = #tpu.dot_dimension_numbers<[1], [0], [0], [1], [0, 0, 1, 1], [], []>} : vector<16x128xbf16>, vector<128x384xbf16>, vector<16x384xf32> -> vector<16x384xf32>
    %53 = vector.broadcast %17 : vector<1x384xf32> to vector<16x384xf32>
    %54 = arith.addf %52, %53 : vector<16x384xf32>
    %55 = vector.extract_strided_slice %50 {offsets = [0, 0], sizes = [16, 128], strides = [1, 1]} : vector<16x384xf32> to vector<16x128xf32>
    %56 = vector.extract_strided_slice %54 {offsets = [0, 0], sizes = [16, 128], strides = [1, 1]} : vector<16x384xf32> to vector<16x128xf32>
    %57 = arith.addf %55, %56 : vector<16x128xf32>
    %58 = arith.negf %57 : vector<16x128xf32>
    %59 = math.exp %58 : vector<16x128xf32>
    %cst_28 = arith.constant 1.000000e+00 : f32
    %60 = vector.broadcast %cst_28 : f32 to vector<16x128xf32>
    %61 = arith.addf %60, %59 : vector<16x128xf32>
    %62 = arith.divf %60, %61 : vector<16x128xf32>
    %63 = vector.extract_strided_slice %50 {offsets = [0, 128], sizes = [16, 128], strides = [1, 1]} : vector<16x384xf32> to vector<16x128xf32>
    %64 = vector.extract_strided_slice %54 {offsets = [0, 128], sizes = [16, 128], strides = [1, 1]} : vector<16x384xf32> to vector<16x128xf32>
    %65 = arith.addf %63, %64 : vector<16x128xf32>
    %66 = arith.negf %65 : vector<16x128xf32>
    %67 = math.exp %66 : vector<16x128xf32>
    %cst_29 = arith.constant 1.000000e+00 : f32
    %68 = vector.broadcast %cst_29 : f32 to vector<16x128xf32>
    %69 = arith.addf %68, %67 : vector<16x128xf32>
    %70 = arith.divf %68, %69 : vector<16x128xf32>
    %71 = vector.extract_strided_slice %50 {offsets = [0, 256], sizes = [16, 128], strides = [1, 1]} : vector<16x384xf32> to vector<16x128xf32>
    %72 = vector.extract_strided_slice %54 {offsets = [0, 256], sizes = [16, 128], strides = [1, 1]} : vector<16x384xf32> to vector<16x128xf32>
    %73 = arith.mulf %62, %72 : vector<16x128xf32>
    %74 = arith.addf %71, %73 : vector<16x128xf32>
    %75 = math.tanh %74 : vector<16x128xf32>
    %cst_30 = arith.constant 1.000000e+00 : f32
    %76 = vector.broadcast %cst_30 : f32 to vector<16x128xf32>
    %77 = arith.subf %76, %70 : vector<16x128xf32>
    %78 = arith.mulf %77, %75 : vector<16x128xf32>
    %79 = arith.mulf %70, %49 : vector<16x128xf32>
    %80 = arith.addf %78, %79 : vector<16x128xf32>
    %c32 = arith.constant 32 : index
    %c0_31 = arith.constant 0 : index
    %81 = vector.load %arg10[%c32, %c0_31] : memref<48x384xf32, #tpu.memory_space<vmem>>, vector<16x384xf32>
    %82 = arith.truncf %80 : vector<16x128xf32> to vector<16x128xbf16>
    %cst_32 = arith.constant dense<0.000000e+00> : vector<16x384xf32>
    %83 = tpu.matmul %82, %15, %cst_32 {dimension_numbers = #tpu.dot_dimension_numbers<[1], [0], [0], [1], [0, 0, 1, 1], [], []>} : vector<16x128xbf16>, vector<128x384xbf16>, vector<16x384xf32> -> vector<16x384xf32>
    %84 = vector.broadcast %17 : vector<1x384xf32> to vector<16x384xf32>
    %85 = arith.addf %83, %84 : vector<16x384xf32>
    %86 = vector.extract_strided_slice %81 {offsets = [0, 0], sizes = [16, 128], strides = [1, 1]} : vector<16x384xf32> to vector<16x128xf32>
    %87 = vector.extract_strided_slice %85 {offsets = [0, 0], sizes = [16, 128], strides = [1, 1]} : vector<16x384xf32> to vector<16x128xf32>
    %88 = arith.addf %86, %87 : vector<16x128xf32>
    %89 = arith.negf %88 : vector<16x128xf32>
    %90 = math.exp %89 : vector<16x128xf32>
    %cst_33 = arith.constant 1.000000e+00 : f32
    %91 = vector.broadcast %cst_33 : f32 to vector<16x128xf32>
    %92 = arith.addf %91, %90 : vector<16x128xf32>
    %93 = arith.divf %91, %92 : vector<16x128xf32>
    %94 = vector.extract_strided_slice %81 {offsets = [0, 128], sizes = [16, 128], strides = [1, 1]} : vector<16x384xf32> to vector<16x128xf32>
    %95 = vector.extract_strided_slice %85 {offsets = [0, 128], sizes = [16, 128], strides = [1, 1]} : vector<16x384xf32> to vector<16x128xf32>
    %96 = arith.addf %94, %95 : vector<16x128xf32>
    %97 = arith.negf %96 : vector<16x128xf32>
    %98 = math.exp %97 : vector<16x128xf32>
    %cst_34 = arith.constant 1.000000e+00 : f32
    %99 = vector.broadcast %cst_34 : f32 to vector<16x128xf32>
    %100 = arith.addf %99, %98 : vector<16x128xf32>
    %101 = arith.divf %99, %100 : vector<16x128xf32>
    %102 = vector.extract_strided_slice %81 {offsets = [0, 256], sizes = [16, 128], strides = [1, 1]} : vector<16x384xf32> to vector<16x128xf32>
    %103 = vector.extract_strided_slice %85 {offsets = [0, 256], sizes = [16, 128], strides = [1, 1]} : vector<16x384xf32> to vector<16x128xf32>
    %104 = arith.mulf %93, %103 : vector<16x128xf32>
    %105 = arith.addf %102, %104 : vector<16x128xf32>
    %106 = math.tanh %105 : vector<16x128xf32>
    %cst_35 = arith.constant 1.000000e+00 : f32
    %107 = vector.broadcast %cst_35 : f32 to vector<16x128xf32>
    %108 = arith.subf %107, %101 : vector<16x128xf32>
    %109 = arith.mulf %108, %106 : vector<16x128xf32>
    %110 = arith.mulf %101, %80 : vector<16x128xf32>
    %111 = arith.addf %109, %110 : vector<16x128xf32>
    %112 = arith.truncf %111 : vector<16x128xf32> to vector<16x128xbf16>
    %c0_36 = arith.constant 0 : index
    %c0_37 = arith.constant 0 : index
    %c0_38 = arith.constant 0 : index
    %113 = vector.load %arg8[%c0_36, %c0_37, %c0_38] : memref<2x128x128xbf16, #tpu.memory_space<vmem>>, vector<1x128x128xbf16>
    %114 = vector.shape_cast %113 : vector<1x128x128xbf16> to vector<128x128xbf16>
    %cst_39 = arith.constant dense<0.000000e+00> : vector<16x128xf32>
    %115 = tpu.matmul %112, %114, %cst_39 {dimension_numbers = #tpu.dot_dimension_numbers<[1], [0], [0], [1], [0, 0, 1, 1], [], []>} : vector<16x128xbf16>, vector<128x128xbf16>, vector<16x128xf32> -> vector<16x128xf32>
    %cst_40 = arith.constant 0.000000e+00 : f32
    %116 = vector.broadcast %cst_40 : f32 to vector<16x128xf32>
    %117 = arith.cmpf oge, %115, %116 : vector<16x128xf32>
    %cst_41 = arith.constant 0.00999999977 : f32
    %118 = vector.broadcast %cst_41 : f32 to vector<16x128xf32>
    %119 = arith.mulf %118, %115 : vector<16x128xf32>
    %120 = arith.select %117, %115, %119 : vector<16x128xi1>, vector<16x128xf32>
    %121 = vector.shape_cast %120 : vector<16x128xf32> to vector<1x16x128xf32>
    %cst_42 = arith.constant dense<0xFF800000> : vector<1xf32>
    %122 = vector.multi_reduction <maximumf>, %121, %cst_42 [1, 2] : vector<1x16x128xf32> to vector<1xf32>
    %123 = vector.shape_cast %122 : vector<1xf32> to vector<1x1x1xf32>
    %124 = vector.extract %123[0, 0, 0] : f32 from vector<1x1x1xf32>
    %125 = vector.broadcast %124 : f32 to vector<16x128xf32>
    %126 = arith.subf %120, %125 : vector<16x128xf32>
    %127 = math.exp %126 : vector<16x128xf32>
    %c0_43 = arith.constant 0 : index
    %c0_44 = arith.constant 0 : index
    %c0_45 = arith.constant 0 : index
    %128 = vector.load %arg3[%c0_43, %c0_44, %c0_45] : memref<2x8x16xbf16, #tpu.memory_space<vmem>>, vector<1x8x16xbf16>
    %129 = vector.shape_cast %128 : vector<1x8x16xbf16> to vector<8x16xbf16>
    %130 = arith.mulf %111, %127 : vector<16x128xf32>
    %131 = arith.truncf %130 : vector<16x128xf32> to vector<16x128xbf16>
    %cst_46 = arith.constant dense<0.000000e+00> : vector<8x128xf32>
    %132 = tpu.matmul %129, %131, %cst_46 {dimension_numbers = #tpu.dot_dimension_numbers<[1], [0], [0], [1], [0, 0, 1, 1], [], []>} : vector<8x16xbf16>, vector<16x128xbf16>, vector<8x128xf32> -> vector<8x128xf32>
    %133 = arith.truncf %127 : vector<16x128xf32> to vector<16x128xbf16>
    %cst_47 = arith.constant dense<0.000000e+00> : vector<8x128xf32>
    %134 = tpu.matmul %129, %133, %cst_47 {dimension_numbers = #tpu.dot_dimension_numbers<[1], [0], [0], [1], [0, 0, 1, 1], [], []>} : vector<8x16xbf16>, vector<16x128xbf16>, vector<8x128xf32> -> vector<8x128xf32>
    %cst_48 = arith.constant 0.000000e+00 : f32
    %135 = vector.broadcast %cst_48 : f32 to vector<8x128xf32>
    %136 = arith.cmpf ogt, %134, %135 : vector<8x128xf32>
    %cst_49 = arith.constant 1.000000e+00 : f32
    %137 = vector.broadcast %cst_49 : f32 to vector<8x128xf32>
    %138 = arith.select %136, %134, %137 : vector<8x128xi1>, vector<8x128xf32>
    %139 = tpu.reciprocal %138 {approx = true} : vector<8x128xf32> -> vector<8x128xf32>
    %140 = arith.mulf %132, %139 : vector<8x128xf32>
    %cst_50 = arith.constant 0.000000e+00 : f32
    %141 = vector.broadcast %cst_50 : f32 to vector<8x128xf32>
    %142 = arith.select %136, %140, %141 : vector<8x128xi1>, vector<8x128xf32>
    %cst_51 = arith.constant 0.000000e+00 : f32
    %143 = vector.broadcast %cst_51 : f32 to vector<8x128xf32>
    %144 = arith.cmpf ogt, %142, %143 : vector<8x128xf32>
    %cst_52 = arith.constant 0.000000e+00 : f32
    %145 = vector.broadcast %cst_52 : f32 to vector<8x128xf32>
    %146 = arith.minimumf %142, %145 : vector<8x128xf32>
    %147 = math.exp %146 : vector<8x128xf32>
    %cst_53 = arith.constant 1.000000e+00 : f32
    %148 = vector.broadcast %cst_53 : f32 to vector<8x128xf32>
    %149 = arith.subf %147, %148 : vector<8x128xf32>
    %150 = arith.select %144, %142, %149 : vector<8x128xi1>, vector<8x128xf32>
    %c0_54 = arith.constant 0 : index
    %c0_55 = arith.constant 0 : index
    %c0_56 = arith.constant 0 : index
    %151 = vector.load %arg9[%c0_54, %c0_55, %c0_56] : memref<2x8x128xf32, #tpu.memory_space<vmem>>, vector<1x8x128xf32>
    %152 = vector.shape_cast %151 : vector<1x8x128xf32> to vector<8x128xf32>
    %153 = vector.shape_cast %150 : vector<8x128xf32> to vector<1x8x128xf32>
    tpu.vector_store %arg9[%c0_54, %c0_55, %c0_56], %153 {strides = array<i32>} : memref<2x8x128xf32, #tpu.memory_space<vmem>>, vector<1x8x128xf32>,
    %154 = vector.extract_strided_slice %3 {offsets = [48, 0], sizes = [48, 32], strides = [1, 1]} : vector<96x32xf32> to vector<48x32xf32>
    %155 = arith.truncf %154 : vector<48x32xf32> to vector<48x32xbf16>
    %c1 = arith.constant 1 : index
    %c0_57 = arith.constant 0 : index
    %c0_58 = arith.constant 0 : index
    %156 = vector.load %arg4[%c1, %c0_57, %c0_58] : memref<2x32x384xbf16, #tpu.memory_space<vmem>>, vector<1x32x384xbf16>
    %157 = vector.shape_cast %156 : vector<1x32x384xbf16> to vector<32x384xbf16>
    %cst_59 = arith.constant dense<0.000000e+00> : vector<48x384xf32>
    %158 = tpu.matmul %155, %157, %cst_59 {dimension_numbers = #tpu.dot_dimension_numbers<[1], [0], [0], [1], [0, 0, 1, 1], [], []>} : vector<48x32xbf16>, vector<32x384xbf16>, vector<48x384xf32> -> vector<48x384xf32>
    %c1_60 = arith.constant 1 : index
    %c0_61 = arith.constant 0 : index
    %c0_62 = arith.constant 0 : index
    %159 = vector.load %arg6[%c1_60, %c0_61, %c0_62] : memref<2x1x384xf32, #tpu.memory_space<vmem>>, vector<1x1x384xf32>
    %160 = vector.shape_cast %159 : vector<1x1x384xf32> to vector<1x384xf32>
    %161 = vector.broadcast %160 : vector<1x384xf32> to vector<48x384xf32>
    %162 = arith.addf %158, %161 : vector<48x384xf32>
    %c0_63 = arith.constant 0 : index
    %c0_64 = arith.constant 0 : index
    %163 = vector.load %arg10[%c0_63, %c0_64] : memref<48x384xf32, #tpu.memory_space<vmem>>, vector<48x384xf32>
    tpu.vector_store %arg10[%c0_63, %c0_64], %162 {strides = array<i32>} : memref<48x384xf32, #tpu.memory_space<vmem>>, vector<48x384xf32>,
    %c1_65 = arith.constant 1 : index
    %c0_66 = arith.constant 0 : index
    %c0_67 = arith.constant 0 : index
    %164 = vector.load %arg5[%c1_65, %c0_66, %c0_67] : memref<2x128x384xbf16, #tpu.memory_space<vmem>>, vector<1x128x384xbf16>
    %165 = vector.shape_cast %164 : vector<1x128x384xbf16> to vector<128x384xbf16>
    %c1_68 = arith.constant 1 : index
    %c0_69 = arith.constant 0 : index
    %c0_70 = arith.constant 0 : index
    %166 = vector.load %arg7[%c1_68, %c0_69, %c0_70] : memref<2x1x384xf32, #tpu.memory_space<vmem>>, vector<1x1x384xf32>
    %167 = vector.shape_cast %166 : vector<1x1x384xf32> to vector<1x384xf32>
    %cst_71 = arith.constant 0.000000e+00 : f32
    %168 = vector.broadcast %cst_71 : f32 to vector<16x128xf32>
    %c0_72 = arith.constant 0 : index
    %c0_73 = arith.constant 0 : index
    %169 = vector.load %arg10[%c0_72, %c0_73] : memref<48x384xf32, #tpu.memory_space<vmem>>, vector<16x384xf32>
    %170 = arith.truncf %168 : vector<16x128xf32> to vector<16x128xbf16>
    %cst_74 = arith.constant dense<0.000000e+00> : vector<16x384xf32>
    %171 = tpu.matmul %170, %165, %cst_74 {dimension_numbers = #tpu.dot_dimension_numbers<[1], [0], [0], [1], [0, 0, 1, 1], [], []>} : vector<16x128xbf16>, vector<128x384xbf16>, vector<16x384xf32> -> vector<16x384xf32>
    %172 = vector.broadcast %167 : vector<1x384xf32> to vector<16x384xf32>
    %173 = arith.addf %171, %172 : vector<16x384xf32>
    %174 = vector.extract_strided_slice %169 {offsets = [0, 0], sizes = [16, 128], strides = [1, 1]} : vector<16x384xf32> to vector<16x128xf32>
    %175 = vector.extract_strided_slice %173 {offsets = [0, 0], sizes = [16, 128], strides = [1, 1]} : vector<16x384xf32> to vector<16x128xf32>
    %176 = arith.addf %174, %175 : vector<16x128xf32>
    %177 = arith.negf %176 : vector<16x128xf32>
    %178 = math.exp %177 : vector<16x128xf32>
    %cst_75 = arith.constant 1.000000e+00 : f32
    %179 = vector.broadcast %cst_75 : f32 to vector<16x128xf32>
    %180 = arith.addf %179, %178 : vector<16x128xf32>
    %181 = arith.divf %179, %180 : vector<16x128xf32>
    %182 = vector.extract_strided_slice %169 {offsets = [0, 128], sizes = [16, 128], strides = [1, 1]} : vector<16x384xf32> to vector<16x128xf32>
    %183 = vector.extract_strided_slice %173 {offsets = [0, 128], sizes = [16, 128], strides = [1, 1]} : vector<16x384xf32> to vector<16x128xf32>
    %184 = arith.addf %182, %183 : vector<16x128xf32>
    %185 = arith.negf %184 : vector<16x128xf32>
    %186 = math.exp %185 : vector<16x128xf32>
    %cst_76 = arith.constant 1.000000e+00 : f32
    %187 = vector.broadcast %cst_76 : f32 to vector<16x128xf32>
    %188 = arith.addf %187, %186 : vector<16x128xf32>
    %189 = arith.divf %187, %188 : vector<16x128xf32>
    %190 = vector.extract_strided_slice %169 {offsets = [0, 256], sizes = [16, 128], strides = [1, 1]} : vector<16x384xf32> to vector<16x128xf32>
    %191 = vector.extract_strided_slice %173 {offsets = [0, 256], sizes = [16, 128], strides = [1, 1]} : vector<16x384xf32> to vector<16x128xf32>
    %192 = arith.mulf %181, %191 : vector<16x128xf32>
    %193 = arith.addf %190, %192 : vector<16x128xf32>
    %194 = math.tanh %193 : vector<16x128xf32>
    %cst_77 = arith.constant 1.000000e+00 : f32
    %195 = vector.broadcast %cst_77 : f32 to vector<16x128xf32>
    %196 = arith.subf %195, %189 : vector<16x128xf32>
    %197 = arith.mulf %196, %194 : vector<16x128xf32>
    %198 = arith.mulf %189, %168 : vector<16x128xf32>
    %199 = arith.addf %197, %198 : vector<16x128xf32>
    %c16_78 = arith.constant 16 : index
    %c0_79 = arith.constant 0 : index
    %200 = vector.load %arg10[%c16_78, %c0_79] : memref<48x384xf32, #tpu.memory_space<vmem>>, vector<16x384xf32>
    %201 = arith.truncf %199 : vector<16x128xf32> to vector<16x128xbf16>
    %cst_80 = arith.constant dense<0.000000e+00> : vector<16x384xf32>
    %202 = tpu.matmul %201, %165, %cst_80 {dimension_numbers = #tpu.dot_dimension_numbers<[1], [0], [0], [1], [0, 0, 1, 1], [], []>} : vector<16x128xbf16>, vector<128x384xbf16>, vector<16x384xf32> -> vector<16x384xf32>
    %203 = vector.broadcast %167 : vector<1x384xf32> to vector<16x384xf32>
    %204 = arith.addf %202, %203 : vector<16x384xf32>
    %205 = vector.extract_strided_slice %200 {offsets = [0, 0], sizes = [16, 128], strides = [1, 1]} : vector<16x384xf32> to vector<16x128xf32>
    %206 = vector.extract_strided_slice %204 {offsets = [0, 0], sizes = [16, 128], strides = [1, 1]} : vector<16x384xf32> to vector<16x128xf32>
    %207 = arith.addf %205, %206 : vector<16x128xf32>
    %208 = arith.negf %207 : vector<16x128xf32>
    %209 = math.exp %208 : vector<16x128xf32>
    %cst_81 = arith.constant 1.000000e+00 : f32
    %210 = vector.broadcast %cst_81 : f32 to vector<16x128xf32>
    %211 = arith.addf %210, %209 : vector<16x128xf32>
    %212 = arith.divf %210, %211 : vector<16x128xf32>
    %213 = vector.extract_strided_slice %200 {offsets = [0, 128], sizes = [16, 128], strides = [1, 1]} : vector<16x384xf32> to vector<16x128xf32>
    %214 = vector.extract_strided_slice %204 {offsets = [0, 128], sizes = [16, 128], strides = [1, 1]} : vector<16x384xf32> to vector<16x128xf32>
    %215 = arith.addf %213, %214 : vector<16x128xf32>
    %216 = arith.negf %215 : vector<16x128xf32>
    %217 = math.exp %216 : vector<16x128xf32>
    %cst_82 = arith.constant 1.000000e+00 : f32
    %218 = vector.broadcast %cst_82 : f32 to vector<16x128xf32>
    %219 = arith.addf %218, %217 : vector<16x128xf32>
    %220 = arith.divf %218, %219 : vector<16x128xf32>
    %221 = vector.extract_strided_slice %200 {offsets = [0, 256], sizes = [16, 128], strides = [1, 1]} : vector<16x384xf32> to vector<16x128xf32>
    %222 = vector.extract_strided_slice %204 {offsets = [0, 256], sizes = [16, 128], strides = [1, 1]} : vector<16x384xf32> to vector<16x128xf32>
    %223 = arith.mulf %212, %222 : vector<16x128xf32>
    %224 = arith.addf %221, %223 : vector<16x128xf32>
    %225 = math.tanh %224 : vector<16x128xf32>
    %cst_83 = arith.constant 1.000000e+00 : f32
    %226 = vector.broadcast %cst_83 : f32 to vector<16x128xf32>
    %227 = arith.subf %226, %220 : vector<16x128xf32>
    %228 = arith.mulf %227, %225 : vector<16x128xf32>
    %229 = arith.mulf %220, %199 : vector<16x128xf32>
    %230 = arith.addf %228, %229 : vector<16x128xf32>
    %c32_84 = arith.constant 32 : index
    %c0_85 = arith.constant 0 : index
    %231 = vector.load %arg10[%c32_84, %c0_85] : memref<48x384xf32, #tpu.memory_space<vmem>>, vector<16x384xf32>
    %232 = arith.truncf %230 : vector<16x128xf32> to vector<16x128xbf16>
    %cst_86 = arith.constant dense<0.000000e+00> : vector<16x384xf32>
    %233 = tpu.matmul %232, %165, %cst_86 {dimension_numbers = #tpu.dot_dimension_numbers<[1], [0], [0], [1], [0, 0, 1, 1], [], []>} : vector<16x128xbf16>, vector<128x384xbf16>, vector<16x384xf32> -> vector<16x384xf32>
    %234 = vector.broadcast %167 : vector<1x384xf32> to vector<16x384xf32>
    %235 = arith.addf %233, %234 : vector<16x384xf32>
    %236 = vector.extract_strided_slice %231 {offsets = [0, 0], sizes = [16, 128], strides = [1, 1]} : vector<16x384xf32> to vector<16x128xf32>
    %237 = vector.extract_strided_slice %235 {offsets = [0, 0], sizes = [16, 128], strides = [1, 1]} : vector<16x384xf32> to vector<16x128xf32>
    %238 = arith.addf %236, %237 : vector<16x128xf32>
    %239 = arith.negf %238 : vector<16x128xf32>
    %240 = math.exp %239 : vector<16x128xf32>
    %cst_87 = arith.constant 1.000000e+00 : f32
    %241 = vector.broadcast %cst_87 : f32 to vector<16x128xf32>
    %242 = arith.addf %241, %240 : vector<16x128xf32>
    %243 = arith.divf %241, %242 : vector<16x128xf32>
    %244 = vector.extract_strided_slice %231 {offsets = [0, 128], sizes = [16, 128], strides = [1, 1]} : vector<16x384xf32> to vector<16x128xf32>
    %245 = vector.extract_strided_slice %235 {offsets = [0, 128], sizes = [16, 128], strides = [1, 1]} : vector<16x384xf32> to vector<16x128xf32>
    %246 = arith.addf %244, %245 : vector<16x128xf32>
    %247 = arith.negf %246 : vector<16x128xf32>
    %248 = math.exp %247 : vector<16x128xf32>
    %cst_88 = arith.constant 1.000000e+00 : f32
    %249 = vector.broadcast %cst_88 : f32 to vector<16x128xf32>
    %250 = arith.addf %249, %248 : vector<16x128xf32>
    %251 = arith.divf %249, %250 : vector<16x128xf32>
    %252 = vector.extract_strided_slice %231 {offsets = [0, 256], sizes = [16, 128], strides = [1, 1]} : vector<16x384xf32> to vector<16x128xf32>
    %253 = vector.extract_strided_slice %235 {offsets = [0, 256], sizes = [16, 128], strides = [1, 1]} : vector<16x384xf32> to vector<16x128xf32>
    %254 = arith.mulf %243, %253 : vector<16x128xf32>
    %255 = arith.addf %252, %254 : vector<16x128xf32>
    %256 = math.tanh %255 : vector<16x128xf32>
    %cst_89 = arith.constant 1.000000e+00 : f32
    %257 = vector.broadcast %cst_89 : f32 to vector<16x128xf32>
    %258 = arith.subf %257, %251 : vector<16x128xf32>
    %259 = arith.mulf %258, %256 : vector<16x128xf32>
    %260 = arith.mulf %251, %230 : vector<16x128xf32>
    %261 = arith.addf %259, %260 : vector<16x128xf32>
    %262 = arith.truncf %261 : vector<16x128xf32> to vector<16x128xbf16>
    %c1_90 = arith.constant 1 : index
    %c0_91 = arith.constant 0 : index
    %c0_92 = arith.constant 0 : index
    %263 = vector.load %arg8[%c1_90, %c0_91, %c0_92] : memref<2x128x128xbf16, #tpu.memory_space<vmem>>, vector<1x128x128xbf16>
    %264 = vector.shape_cast %263 : vector<1x128x128xbf16> to vector<128x128xbf16>
    %cst_93 = arith.constant dense<0.000000e+00> : vector<16x128xf32>
    %265 = tpu.matmul %262, %264, %cst_93 {dimension_numbers = #tpu.dot_dimension_numbers<[1], [0], [0], [1], [0, 0, 1, 1], [], []>} : vector<16x128xbf16>, vector<128x128xbf16>, vector<16x128xf32> -> vector<16x128xf32>
    %cst_94 = arith.constant 0.000000e+00 : f32
    %266 = vector.broadcast %cst_94 : f32 to vector<16x128xf32>
    %267 = arith.cmpf oge, %265, %266 : vector<16x128xf32>
    %cst_95 = arith.constant 0.00999999977 : f32
    %268 = vector.broadcast %cst_95 : f32 to vector<16x128xf32>
    %269 = arith.mulf %268, %265 : vector<16x128xf32>
    %270 = arith.select %267, %265, %269 : vector<16x128xi1>, vector<16x128xf32>
    %271 = vector.shape_cast %270 : vector<16x128xf32> to vector<1x16x128xf32>
    %cst_96 = arith.constant dense<0xFF800000> : vector<1xf32>
    %272 = vector.multi_reduction <maximumf>, %271, %cst_96 [1, 2] : vector<1x16x128xf32> to vector<1xf32>
    %273 = vector.shape_cast %272 : vector<1xf32> to vector<1x1x1xf32>
    %274 = vector.extract %273[0, 0, 0] : f32 from vector<1x1x1xf32>
    %275 = vector.broadcast %274 : f32 to vector<16x128xf32>
    %276 = arith.subf %270, %275 : vector<16x128xf32>
    %277 = math.exp %276 : vector<16x128xf32>
    %c1_97 = arith.constant 1 : index
    %c0_98 = arith.constant 0 : index
    %c0_99 = arith.constant 0 : index
    %278 = vector.load %arg3[%c1_97, %c0_98, %c0_99] : memref<2x8x16xbf16, #tpu.memory_space<vmem>>, vector<1x8x16xbf16>
    %279 = vector.shape_cast %278 : vector<1x8x16xbf16> to vector<8x16xbf16>
    %280 = arith.mulf %261, %277 : vector<16x128xf32>
    %281 = arith.truncf %280 : vector<16x128xf32> to vector<16x128xbf16>
    %cst_100 = arith.constant dense<0.000000e+00> : vector<8x128xf32>
    %282 = tpu.matmul %279, %281, %cst_100 {dimension_numbers = #tpu.dot_dimension_numbers<[1], [0], [0], [1], [0, 0, 1, 1], [], []>} : vector<8x16xbf16>, vector<16x128xbf16>, vector<8x128xf32> -> vector<8x128xf32>
    %283 = arith.truncf %277 : vector<16x128xf32> to vector<16x128xbf16>
    %cst_101 = arith.constant dense<0.000000e+00> : vector<8x128xf32>
    %284 = tpu.matmul %279, %283, %cst_101 {dimension_numbers = #tpu.dot_dimension_numbers<[1], [0], [0], [1], [0, 0, 1, 1], [], []>} : vector<8x16xbf16>, vector<16x128xbf16>, vector<8x128xf32> -> vector<8x128xf32>
    %cst_102 = arith.constant 0.000000e+00 : f32
    %285 = vector.broadcast %cst_102 : f32 to vector<8x128xf32>
    %286 = arith.cmpf ogt, %284, %285 : vector<8x128xf32>
    %cst_103 = arith.constant 1.000000e+00 : f32
    %287 = vector.broadcast %cst_103 : f32 to vector<8x128xf32>
    %288 = arith.select %286, %284, %287 : vector<8x128xi1>, vector<8x128xf32>
    %289 = tpu.reciprocal %288 {approx = true} : vector<8x128xf32> -> vector<8x128xf32>
    %290 = arith.mulf %282, %289 : vector<8x128xf32>
    %cst_104 = arith.constant 0.000000e+00 : f32
    %291 = vector.broadcast %cst_104 : f32 to vector<8x128xf32>
    %292 = arith.select %286, %290, %291 : vector<8x128xi1>, vector<8x128xf32>
    %cst_105 = arith.constant 0.000000e+00 : f32
    %293 = vector.broadcast %cst_105 : f32 to vector<8x128xf32>
    %294 = arith.cmpf ogt, %292, %293 : vector<8x128xf32>
    %cst_106 = arith.constant 0.000000e+00 : f32
    %295 = vector.broadcast %cst_106 : f32 to vector<8x128xf32>
    %296 = arith.minimumf %292, %295 : vector<8x128xf32>
    %297 = math.exp %296 : vector<8x128xf32>
    %cst_107 = arith.constant 1.000000e+00 : f32
    %298 = vector.broadcast %cst_107 : f32 to vector<8x128xf32>
    %299 = arith.subf %297, %298 : vector<8x128xf32>
    %300 = arith.select %294, %292, %299 : vector<8x128xi1>, vector<8x128xf32>
    %c1_108 = arith.constant 1 : index
    %c0_109 = arith.constant 0 : index
    %c0_110 = arith.constant 0 : index
    %301 = vector.load %arg9[%c1_108, %c0_109, %c0_110] : memref<2x8x128xf32, #tpu.memory_space<vmem>>, vector<1x8x128xf32>
    %302 = vector.shape_cast %301 : vector<1x8x128xf32> to vector<8x128xf32>
    %303 = vector.shape_cast %300 : vector<8x128xf32> to vector<1x8x128xf32>
    tpu.vector_store %arg9[%c1_108, %c0_109, %c0_110], %303 {strides = array<i32>} : memref<2x8x128xf32, #tpu.memory_space<vmem>>, vector<1x8x128xf32>,
    return
  }
  func.func @transform_0(%arg0: i32) -> (i32, i32, i32) {
    %c0_i32 = arith.constant 0 : i32
    %c0_i32_0 = arith.constant 0 : i32
    %c0_i32_1 = arith.constant 0 : i32
    return %arg0, %c0_i32, %c0_i32_0 : i32, i32, i32
  }
  func.func @transform_1(%arg0: i32) -> (i32, i32) {
    %c0_i32 = arith.constant 0 : i32
    %c0_i32_0 = arith.constant 0 : i32
    %c0_i32_1 = arith.constant 0 : i32
    return %c0_i32, %c0_i32_0 : i32, i32
  }
  func.func @transform_2(%arg0: i32) -> (i32, i32, i32) {
    %c0_i32 = arith.constant 0 : i32
    %c0_i32_0 = arith.constant 0 : i32
    %c0_i32_1 = arith.constant 0 : i32
    return %arg0, %c0_i32, %c0_i32_0 : i32, i32, i32
  }
  func.func @transform_3(%arg0: i32) -> (i32, i32, i32) {
    %c0_i32 = arith.constant 0 : i32
    %c0_i32_0 = arith.constant 0 : i32
    %c0_i32_1 = arith.constant 0 : i32
    return %arg0, %c0_i32, %c0_i32_0 : i32, i32, i32
  }
  func.func @transform_4(%arg0: i32) -> (i32, i32, i32) {
    %c0_i32 = arith.constant 0 : i32
    %c0_i32_0 = arith.constant 0 : i32
    %c0_i32_1 = arith.constant 0 : i32
    return %arg0, %c0_i32, %c0_i32_0 : i32, i32, i32
  }
  func.func @transform_5(%arg0: i32) -> (i32, i32, i32) {
    %c0_i32 = arith.constant 0 : i32
    %c0_i32_0 = arith.constant 0 : i32
    %c0_i32_1 = arith.constant 0 : i32
    return %arg0, %c0_i32, %c0_i32_0 : i32, i32, i32
  }
  func.func @transform_6(%arg0: i32) -> (i32, i32, i32) {
    %c0_i32 = arith.constant 0 : i32
    %c0_i32_0 = arith.constant 0 : i32
    %c0_i32_1 = arith.constant 0 : i32
    return %arg0, %c0_i32, %c0_i32_0 : i32, i32, i32
  }
  func.func @transform_7(%arg0: i32) -> (i32, i32, i32) {
    %c0_i32 = arith.constant 0 : i32
    %c0_i32_0 = arith.constant 0 : i32
    %c0_i32_1 = arith.constant 0 : i32
    return %arg0, %c0_i32, %c0_i32_0 : i32, i32, i32
  }
  func.func @transform_8(%arg0: i32) -> (i32, i32, i32) {
    %c0_i32 = arith.constant 0 : i32
    %c0_i32_0 = arith.constant 0 : i32
    %c0_i32_1 = arith.constant 0 : i32
    return %arg0, %c0_i32, %c0_i32_0 : i32, i32, i32
  }
}

</mosaic_0001>

<llo_original>
// kernel: magnn_lp_forward.1
$region0: #{magnn_lp_forward.1}
  #allocation0 [shape = 'u32[]', space=smem, size = 0x4, offset = 0x4, fixed_abs, tag = 'smem constant byte address 0x4 - core index']
  #allocation1 [shape = 'u32[72,128]{1,0:T(1,128)}', space=vmem, size = 0x9000, scoped, tag = 'internal scratch']
  #allocation2 [shape = 'f32[48,384]{1,0:T(8,128)}', space=vmem, size = 0x12000, scoped, tag = 'scratch operand']
  %s0 = inlined_call_operand.vmem [shape: bf16[4,48,24], index: 0, kind: input, shape index: {}]
  %s1 = inlined_call_operand.vmem [shape: bf16[24,32], index: 1, kind: input, shape index: {}]
  %s2 = inlined_call_operand.vmem [shape: bf16[4,8,16], index: 2, kind: input, shape index: {}]
  %s3 = inlined_call_operand.hbm [shape: bf16[4,32,384], index: 3, kind: input, shape index: {}]
  %s4 = inlined_call_operand.hbm [shape: bf16[4,128,384], index: 4, kind: input, shape index: {}]
  %s5 = inlined_call_operand.vmem [shape: f32[4,1,384], index: 5, kind: input, shape index: {}]
  %s6 = inlined_call_operand.vmem [shape: f32[4,1,384], index: 6, kind: input, shape index: {}]
  %s7 = inlined_call_operand.hbm [shape: bf16[4,128,128], index: 7, kind: input, shape index: {}]
  %s8 = inlined_call_operand.vmem [shape: f32[4,8,128], index: 8, kind: output, shape index: {}]
  %s9 = sld [smem:[#allocation0]]
  $region77: #{magnn_lp_forward.1} parent=0
    _
  %s11 = ssub.s32 1, %s9
  %s12 = scalar_select 0, %s11, %s9
  $region1: #{magnn_lp_forward.1} parent=0
    #allocation3 [shape = 'u8[98304]{0}', space=vmem, size = 0x18000, scoped, tag = 'input window, operand 3']
    #allocation4 [shape = 's32[2]{0}', space=sflag, size = 0x8, scoped, tag = 'scoped memory for magnn_lp_forward.1']
    #allocation5 [shape = 'u8[393216]{0}', space=vmem, size = 0x60000, scoped, tag = 'input window, operand 4']
    #allocation6 [shape = 's32[2]{0}', space=sflag, size = 0x8, scoped, tag = 'scoped memory for magnn_lp_forward.1']
    #allocation7 [shape = 'u8[131072]{0}', space=vmem, size = 0x20000, scoped, tag = 'input window, operand 7']
    %13 = vsyncpa [#allocation4], 0
    %s14 = scalar_lea.sflag [#allocation4], 1
    %15 = vsyncpa %s14, 0
    %16 = vsyncpa [#allocation6], 0
    %s17 = scalar_lea.sflag [#allocation6], 1
    %18 = vsyncpa %s17, 0
    loop: start=0, step=1, limit=4
    $region2: #{magnn_lp_forward.1} parent=1 // loop_pre_header
      _
    $region3: #{magnn_lp_forward.1} parent=1 // loop_header
      %s20 = sphi 0, %s24
      %p21 = scmp.ge.s32.totalorder %s20, 4
      %s30 = sphi 0, %s32
      %s33 = sphi 0, %s30
      %s34 = sphi 0, %s33
      %s50 = sphi 0, %s34
      %s54 = sphi 0, %s54
      %s56 = sphi 0, %s54
      %s57 = sphi 0, %s56
      %s71 = sphi 0, %s57
      %s77 = sphi 0, %s79
      %s80 = sphi 0, %s77
      %s81 = sphi 0, %s80
      %s97 = sphi 0, %s81
      %s103 = sphi 0, %s105
      %s106 = sphi 0, %s103
      %s107 = sphi 0, %s106
      %s123 = sphi 0, %s107
      %s129 = sphi 0, %s131
      %s132 = sphi 0, %s129
      %s133 = sphi 0, %s132
      %s149 = sphi 0, %s133
      %s155 = sphi 0, %s157
      %s158 = sphi 0, %s155
      %s159 = sphi 0, %s158
      %s175 = sphi 0, %s159
      %s181 = sphi 0, %s183
      %s184 = sphi 0, %s181
      %s185 = sphi 0, %s184
      %s201 = sphi 0, %s185
      %s207 = sphi 0, %s209
      %s210 = sphi 0, %s207
      %s211 = sphi 0, %s210
      %s227 = sphi 0, %s211
      %s233 = sphi 0, %s235
      %s236 = sphi 0, %s233
      %s237 = sphi 0, %s236
      %s253 = sphi 0, %s237
    $region4: #{magnn_lp_forward.1} parent=1 // loop_header_branch
      %23 = sbr.rel (%p21) target = $region8
    $region5: #{magnn_lp_forward.1} parent=1 // loop_body
      %s25 = ssub.s32 %s20, 1
      %s26 = ssub.s32 %s20, 2
      %s27 = sadd.s32 %s20, 1
      %s28 = ssub.s32 %s20, %s27
      %p29 = scmp.eq.s32.totalorder %s28, 0
      %s31 = sadd.s32 %s30, 1
      %s32 = scalar_select %p29, %s30, %s31
      %p35 = pneg %p29
      %p36 = scmp.eq.s32.totalorder %s20, 1
      %p37 = por %p35, %p36
      %p38 = scmp.ne.s32.totalorder %s30, %s33
      %p39 = scmp.eq.s32.totalorder %s20, 0
      %p40 = por %p38, %p39
      %p41 = scmp.ne.s32.totalorder %s30, %s33
      %p42 = scmp.eq.s32.totalorder %s25, 1
      %p43 = por %p41, %p42
      %p44 = scmp.ne.s32.totalorder %s33, %s34
      %p45 = scmp.eq.s32.totalorder %s25, 0
      %p46 = por %p44, %p45
      %p47 = scmp.ne.s32.totalorder %s33, %s34
      %p48 = scmp.eq.s32.totalorder %s26, 1
      %p49 = por %p47, %p48
      %p51 = scmp.ne.s32.totalorder %s34, %s50
      %p52 = scmp.eq.s32.totalorder %s26, 0
      %p53 = por %p51, %p52
      %s55 = sadd.s32 %s54, 1
      %p58 = scmp.eq.s32.totalorder %s20, 1
      %p59 = scmp.ne.s32.totalorder %s54, %s56
      %p60 = scmp.eq.s32.totalorder %s20, 0
      %p61 = por %p59, %p60
      %p62 = scmp.ne.s32.totalorder %s54, %s56
      %p63 = scmp.eq.s32.totalorder %s25, 1
      %p64 = por %p62, %p63
      %p65 = scmp.ne.s32.totalorder %s56, %s57
      %p66 = scmp.eq.s32.totalorder %s25, 0
      %p67 = por %p65, %p66
      %p68 = scmp.ne.s32.totalorder %s56, %s57
      %p69 = scmp.eq.s32.totalorder %s26, 1
      %p70 = por %p68, %p69
      %p72 = scmp.ne.s32.totalorder %s57, %s71
      %p73 = scmp.eq.s32.totalorder %s26, 0
      %p74 = por %p72, %p73
      %s75 = ssub.s32 %s20, %s27
      %p76 = scmp.eq.s32.totalorder %s75, 0
      %s78 = sadd.s32 %s77, 1
      %s79 = scalar_select %p76, %s77, %s78
      %p82 = pneg %p76
      %p83 = scmp.eq.s32.totalorder %s20, 1
      %p84 = por %p82, %p83
      %p85 = scmp.ne.s32.totalorder %s77, %s80
      %p86 = scmp.eq.s32.totalorder %s20, 0
      %p87 = por %p85, %p86
      %p88 = scmp.ne.s32.totalorder %s77, %s80
      %p89 = scmp.eq.s32.totalorder %s25, 1
      %p90 = por %p88, %p89
      %p91 = scmp.ne.s32.totalorder %s80, %s81
      %p92 = scmp.eq.s32.totalorder %s25, 0
      %p93 = por %p91, %p92
      %p94 = scmp.ne.s32.totalorder %s80, %s81
      %p95 = scmp.eq.s32.totalorder %s26, 1
      %p96 = por %p94, %p95
      %p98 = scmp.ne.s32.totalorder %s81, %s97
      %p99 = scmp.eq.s32.totalorder %s26, 0
      %p100 = por %p98, %p99
      %s101 = ssub.s32 %s20, %s27
      %p102 = scmp.eq.s32.totalorder %s101, 0
      %s104 = sadd.s32 %s103, 1
      %s105 = scalar_select %p102, %s103, %s104
      %p108 = pneg %p102
      %p109 = scmp.eq.s32.totalorder %s20, 1
      %p110 = por %p108, %p109
      %p111 = scmp.ne.s32.totalorder %s103, %s106
      %p112 = scmp.eq.s32.totalorder %s20, 0
      %p113 = por %p111, %p112
      %p114 = scmp.ne.s32.totalorder %s103, %s106
      %p115 = scmp.eq.s32.totalorder %s25, 1
      %p116 = por %p114, %p115
      %p117 = scmp.ne.s32.totalorder %s106, %s107
      %p118 = scmp.eq.s32.totalorder %s25, 0
      %p119 = por %p117, %p118
      %p120 = scmp.ne.s32.totalorder %s106, %s107
      %p121 = scmp.eq.s32.totalorder %s26, 1
      %p122 = por %p120, %p121
      %p124 = scmp.ne.s32.totalorder %s107, %s123
      %p125 = scmp.eq.s32.totalorder %s26, 0
      %p126 = por %p124, %p125
      %s127 = ssub.s32 %s20, %s27
      %p128 = scmp.eq.s32.totalorder %s127, 0
      %s130 = sadd.s32 %s129, 1
      %s131 = scalar_select %p128, %s129, %s130
      %p134 = pneg %p128
      %p135 = scmp.eq.s32.totalorder %s20, 1
      %p136 = por %p134, %p135
      %p137 = scmp.ne.s32.totalorder %s129, %s132
      %p138 = scmp.eq.s32.totalorder %s20, 0
      %p139 = por %p137, %p138
      %p140 = scmp.ne.s32.totalorder %s129, %s132
      %p141 = scmp.eq.s32.totalorder %s25, 1
      %p142 = por %p140, %p141
      %p143 = scmp.ne.s32.totalorder %s132, %s133
      %p144 = scmp.eq.s32.totalorder %s25, 0
      %p145 = por %p143, %p144
      %p146 = scmp.ne.s32.totalorder %s132, %s133
      %p147 = scmp.eq.s32.totalorder %s26, 1
      %p148 = por %p146, %p147
      %p150 = scmp.ne.s32.totalorder %s133, %s149
      %p151 = scmp.eq.s32.totalorder %s26, 0
      %p152 = por %p150, %p151
      %s153 = ssub.s32 %s20, %s27
      %p154 = scmp.eq.s32.totalorder %s153, 0
      %s156 = sadd.s32 %s155, 1
      %s157 = scalar_select %p154, %s155, %s156
      %p160 = pneg %p154
      %p161 = scmp.eq.s32.totalorder %s20, 1
      %p162 = por %p160, %p161
      %p163 = scmp.ne.s32.totalorder %s155, %s158
      %p164 = scmp.eq.s32.totalorder %s20, 0
      %p165 = por %p163, %p164
      %p166 = scmp.ne.s32.totalorder %s155, %s158
      %p167 = scmp.eq.s32.totalorder %s25, 1
      %p168 = por %p166, %p167
      %p169 = scmp.ne.s32.totalorder %s158, %s159
      %p170 = scmp.eq.s32.totalorder %s25, 0
      %p171 = por %p169, %p170
      %p172 = scmp.ne.s32.totalorder %s158, %s159
      %p173 = scmp.eq.s32.totalorder %s26, 1
      %p174 = por %p172, %p173
      %p176 = scmp.ne.s32.totalorder %s159, %s175
      %p177 = scmp.eq.s32.totalorder %s26, 0
      %p178 = por %p176, %p177
      %s179 = ssub.s32 %s20, %s27
      %p180 = scmp.eq.s32.totalorder %s179, 0
      %s182 = sadd.s32 %s181, 1
      %s183 = scalar_select %p180, %s181, %s182
      %p186 = pneg %p180
      %p187 = scmp.eq.s32.totalorder %s20, 1
      %p188 = por %p186, %p187
      %p189 = scmp.ne.s32.totalorder %s181, %s184
      %p190 = scmp.eq.s32.totalorder %s20, 0
      %p191 = por %p189, %p190
      %p192 = scmp.ne.s32.totalorder %s181, %s184
      %p193 = scmp.eq.s32.totalorder %s25, 1
      %p194 = por %p192, %p193
      %p195 = scmp.ne.s32.totalorder %s184, %s185
      %p196 = scmp.eq.s32.totalorder %s25, 0
      %p197 = por %p195, %p196
      %p198 = scmp.ne.s32.totalorder %s184, %s185
      %p199 = scmp.eq.s32.totalorder %s26, 1
      %p200 = por %p198, %p199
      %p202 = scmp.ne.s32.totalorder %s185, %s201
      %p203 = scmp.eq.s32.totalorder %s26, 0
      %p204 = por %p202, %p203
      %s205 = ssub.s32 %s20, %s27
      %p206 = scmp.eq.s32.totalorder %s205, 0
      %s208 = sadd.s32 %s207, 1
      %s209 = scalar_select %p206, %s207, %s208
      %p212 = pneg %p206
      %p213 = scmp.eq.s32.totalorder %s20, 1
      %p214 = por %p212, %p213
      %p215 = scmp.ne.s32.totalorder %s207, %s210
      %p216 = scmp.eq.s32.totalorder %s20, 0
      %p217 = por %p215, %p216
      %p218 = scmp.ne.s32.totalorder %s207, %s210
      %p219 = scmp.eq.s32.totalorder %s25, 1
      %p220 = por %p218, %p219
      %p221 = scmp.ne.s32.totalorder %s210, %s211
      %p222 = scmp.eq.s32.totalorder %s25, 0
      %p223 = por %p221, %p222
      %p224 = scmp.ne.s32.totalorder %s210, %s211
      %p225 = scmp.eq.s32.totalorder %s26, 1
      %p226 = por %p224, %p225
      %p228 = scmp.ne.s32.totalorder %s211, %s227
      %p229 = scmp.eq.s32.totalorder %s26, 0
      %p230 = por %p228, %p229
      %s231 = ssub.s32 %s20, %s27
      %p232 = scmp.eq.s32.totalorder %s231, 0
      %s234 = sadd.s32 %s233, 1
      %s235 = scalar_select %p232, %s233, %s234
      %p238 = pneg %p232
      %p239 = scmp.eq.s32.totalorder %s20, 1
      %p240 = por %p238, %p239
      %p241 = scmp.ne.s32.totalorder %s233, %s236
      %p242 = scmp.eq.s32.totalorder %s20, 0
      %p243 = por %p241, %p242
      %p244 = scmp.ne.s32.totalorder %s233, %s236
      %p245 = scmp.eq.s32.totalorder %s25, 1
      %p246 = por %p244, %p245
      %p247 = scmp.ne.s32.totalorder %s236, %s237
      %p248 = scmp.eq.s32.totalorder %s25, 0
      %p249 = por %p247, %p248
      %p250 = scmp.ne.s32.totalorder %s236, %s237
      %p251 = scmp.eq.s32.totalorder %s26, 1
      %p252 = por %p250, %p251
      %p254 = scmp.ne.s32.totalorder %s237, %s253
      %p255 = scmp.eq.s32.totalorder %s26, 0
      %p256 = por %p254, %p255
      %p257 = scmp.le.s32.totalorder 1, %s20
      %p258 = scmp.lt.s32.totalorder %s20, 3
      %p259 = pnand %p257, %p258
      %p260 = pneg %p259
      // Predicated region
      $region9: #{magnn_lp_forward.1} parent=5 // pred_check
        _
      $region10: #{magnn_lp_forward.1} parent=5 // pred_check_branch
        %262 = sbr.rel (%p259) target = $region12
      $region11: #{magnn_lp_forward.1} parent=5 // pred_region
        %s263 = ssub.s32 %s20, 1
        // Predicated region
        $region13: #{magnn_lp_forward.1} parent=11 // pred_check
          %p264 = pneg %p67
        $region14: #{magnn_lp_forward.1} parent=11 // pred_check_branch
          %266 = sbr.rel (%p264) target = $region16
        $region15: #{magnn_lp_forward.1} parent=11 // pred_region
          _
        $region16: #{magnn_lp_forward.1} parent=11 // pred_fallthru
          _
      $region12: #{magnn_lp_forward.1} parent=5 // pred_fallthru
        _
      %p267 = scmp.lt.s32.totalorder %s20, 2
      // Predicated region
      $region17: #{magnn_lp_forward.1} parent=5 // pred_check
        %p268 = pneg %p267
      $region18: #{magnn_lp_forward.1} parent=5 // pred_check_branch
        %270 = sbr.rel (%p268) target = $region20
      $region19: #{magnn_lp_forward.1} parent=5 // pred_region
        // Predicated region
        $region21: #{magnn_lp_forward.1} parent=19 // pred_check
          %p271 = pneg %p40
        $region22: #{magnn_lp_forward.1} parent=19 // pred_check_branch
          %273 = sbr.rel (%p271) target = $region24
        $region23: #{magnn_lp_forward.1} parent=19 // pred_region
          %s274 = smul.u32 2, %s20
          %p275 = scmp.lt.s32.totalorder %s274, 3
          %s276 = scalar_select %p275, %s274, 3
          %s277 = smul.addr %s276, 6
          %s278 = smul.addr %s277, 4
          %s279 = scalar_lea.vmem %s0, %s278
          %s280 = smul.u32 2, %s20
        $region24: #{magnn_lp_forward.1} parent=19 // pred_fallthru
          _
        // Predicated region
        $region25: #{magnn_lp_forward.1} parent=19 // pred_check
          %p281 = pneg %p87
        $region26: #{magnn_lp_forward.1} parent=19 // pred_check_branch
          %283 = sbr.rel (%p281) target = $region28
        $region27: #{magnn_lp_forward.1} parent=19 // pred_region
          %s284 = smul.u32 2, %s20
          %p285 = scmp.lt.s32.totalorder %s284, 3
          %s286 = scalar_select %p285, %s284, 3
          %s287 = smul.addr %s286, 4
          %s288 = scalar_lea.vmem %s2, %s287
          %s289 = smul.u32 2, %s20
        $region28: #{magnn_lp_forward.1} parent=19 // pred_fallthru
          _
        // Predicated region
        $region29: #{magnn_lp_forward.1} parent=19 // pred_check
          %p290 = pneg %p113
        $region30: #{magnn_lp_forward.1} parent=19 // pred_check_branch
          %292 = sbr.rel (%p290) target = $region32
        $region31: #{magnn_lp_forward.1} parent=19 // pred_region
          %s293 = sand.u32 %s103, 1
          %s294 = scalar_lea.sflag [#allocation4], %s293
          %s295 = sand.u32 %s103, 1
          %s296 = smul.addr %s295, 96
          %s297 = scalar_lea.vmem [#allocation3], %s296
          %s298 = smul.u32 2, %s20
          %300 = vsyncadd %s294, 0
          %s301 = smul.addr %s298, 12
          %s302 = smul.addr %s301, 4
          %s303 = scalar_lea.hbm %s3, %s302
          %s304 = sshll.u32 %s303, 4
          %s305 = int_to_ptr.hbm [resolvable:$true] %s304
          %s306 = sshll.u32 %s297, 4
          %s307 = int_to_ptr.vmem [resolvable:$true] %s306
          %312 = dma.hbm_to_vmem [thread:$0]  %s305, 1536, %s307, %s294, 192, 192, 12
        $region32: #{magnn_lp_forward.1} parent=19 // pred_fallthru
          _
        // Predicated region
        $region33: #{magnn_lp_forward.1} parent=19 // pred_check
          %p313 = pneg %p139
        $region34: #{magnn_lp_forward.1} parent=19 // pred_check_branch
          %315 = sbr.rel (%p313) target = $region36
        $region35: #{magnn_lp_forward.1} parent=19 // pred_region
          %s316 = sand.u32 %s20, 1
          %s317 = scalar_lea.sflag [#allocation6], %s316
          %s318 = sand.u32 %s129, 1
          %s319 = smul.addr %s318, 384
          %s320 = scalar_lea.vmem [#allocation5], %s319
          %s321 = smul.u32 2, %s20
          %323 = vsyncadd %s317, 0
          %s324 = smul.addr %s321, 48
          %s325 = smul.addr %s324, 4
          %s326 = scalar_lea.hbm %s4, %s325
          %s327 = sshll.u32 %s326, 4
          %s328 = int_to_ptr.hbm [resolvable:$true] %s327
          %s329 = sshll.u32 %s320, 4
          %s330 = int_to_ptr.vmem [resolvable:$true] %s329
          %335 = dma.hbm_to_vmem [thread:$0]  %s328, 6144, %s330, %s317, 192, 192, 12
        $region36: #{magnn_lp_forward.1} parent=19 // pred_fallthru
          _
        // Predicated region
        $region37: #{magnn_lp_forward.1} parent=19 // pred_check
          %p336 = pneg %p165
        $region38: #{magnn_lp_forward.1} parent=19 // pred_check_branch
          %338 = sbr.rel (%p336) target = $region40
        $region39: #{magnn_lp_forward.1} parent=19 // pred_region
          %s339 = smul.u32 2, %s20
          %p340 = scmp.lt.s32.totalorder %s339, 3
          %s341 = scalar_select %p340, %s339, 3
          %s342 = smul.addr %s341, 3
          %s343 = scalar_lea.vmem %s5, %s342
          %s344 = smul.u32 2, %s20
        $region40: #{magnn_lp_forward.1} parent=19 // pred_fallthru
          _
        // Predicated region
        $region41: #{magnn_lp_forward.1} parent=19 // pred_check
          %p345 = pneg %p191
        $region42: #{magnn_lp_forward.1} parent=19 // pred_check_branch
          %347 = sbr.rel (%p345) target = $region44
        $region43: #{magnn_lp_forward.1} parent=19 // pred_region
          %s348 = smul.u32 2, %s20
          %p349 = scmp.lt.s32.totalorder %s348, 3
          %s350 = scalar_select %p349, %s348, 3
          %s351 = smul.addr %s350, 3
          %s352 = scalar_lea.vmem %s6, %s351
          %s353 = smul.u32 2, %s20
        $region44: #{magnn_lp_forward.1} parent=19 // pred_fallthru
          _
        // Predicated region
        $region45: #{magnn_lp_forward.1} parent=19 // pred_check
          %p354 = pneg %p217
        $region46: #{magnn_lp_forward.1} parent=19 // pred_check_branch
          %356 = sbr.rel (%p354) target = $region48
        $region47: #{magnn_lp_forward.1} parent=19 // pred_region
          %s357 = sand.u32 %s20, 1
          %s358 = scalar_lea.sflag [#allocation6], %s357
          %s359 = sand.u32 %s207, 1
          %s360 = smul.addr %s359, 128
          %s361 = scalar_lea.vmem [#allocation7], %s360
          %s362 = smul.u32 2, %s20
          %364 = vsyncadd %s358, 0
          %s365 = smul.addr %s362, 16
          %s366 = smul.addr %s365, 4
          %s367 = scalar_lea.hbm %s7, %s366
          %s368 = sshll.u32 %s367, 4
          %s369 = int_to_ptr.hbm [resolvable:$true] %s368
          %s370 = sshll.u32 %s361, 4
          %s371 = int_to_ptr.vmem [resolvable:$true] %s370
          %376 = dma.hbm_to_vmem [thread:$0]  %s369, 2048, %s371, %s358, 64, 64, 4
        $region48: #{magnn_lp_forward.1} parent=19 // pred_fallthru
          _
      $region20: #{magnn_lp_forward.1} parent=5 // pred_fallthru
        _
      %p377 = scmp.le.s32.totalorder 1, %s20
      %p378 = scmp.lt.s32.totalorder %s20, 3
      %p379 = pnand %p377, %p378
      %p380 = pneg %p379
      // Predicated region
      $region49: #{magnn_lp_forward.1} parent=5 // pred_check
        _
      $region50: #{magnn_lp_forward.1} parent=5 // pred_check_branch
        %382 = sbr.rel (%p379) target = $region52
      $region51: #{magnn_lp_forward.1} parent=5 // pred_region
        %s383 = ssub.s32 %s20, 1
        %s384 = sand.u32 %s106, 1
        %s385 = scalar_lea.sflag [#allocation4], %s384
        %s386 = sand.u32 %s106, 1
        %s387 = smul.addr %s386, 96
        %s388 = scalar_lea.vmem [#allocation3], %s387
        // Predicated region
        $region53: #{magnn_lp_forward.1} parent=51 // pred_check
          %p389 = pneg %p119
        $region54: #{magnn_lp_forward.1} parent=51 // pred_check_branch
          %391 = sbr.rel (%p389) target = $region56
        $region55: #{magnn_lp_forward.1} parent=51 // pred_region
          %393 = dma.done %s385, 1536
        $region56: #{magnn_lp_forward.1} parent=51 // pred_fallthru
          _
        %s394 = sand.u32 %s25, 1
        %s395 = scalar_lea.sflag [#allocation6], %s394
        %s396 = sand.u32 %s132, 1
        %s397 = smul.addr %s396, 384
        %s398 = scalar_lea.vmem [#allocation5], %s397
        // Predicated region
        $region57: #{magnn_lp_forward.1} parent=51 // pred_check
          %p399 = pneg %p145
        $region58: #{magnn_lp_forward.1} parent=51 // pred_check_branch
          %401 = sbr.rel (%p399) target = $region60
        $region59: #{magnn_lp_forward.1} parent=51 // pred_region
          %403 = dma.done %s395, 6144
        $region60: #{magnn_lp_forward.1} parent=51 // pred_fallthru
          _
        %s404 = sand.u32 %s25, 1
        %s405 = scalar_lea.sflag [#allocation6], %s404
        %s406 = sand.u32 %s210, 1
        %s407 = smul.addr %s406, 128
        %s408 = scalar_lea.vmem [#allocation7], %s407
        // Predicated region
        $region61: #{magnn_lp_forward.1} parent=51 // pred_check
          %p409 = pneg %p223
        $region62: #{magnn_lp_forward.1} parent=51 // pred_check_branch
          %411 = sbr.rel (%p409) target = $region64
        $region63: #{magnn_lp_forward.1} parent=51 // pred_region
          %413 = dma.done %s405, 2048
        $region64: #{magnn_lp_forward.1} parent=51 // pred_fallthru
          _
        %s414 = smul.u32 2, %s25
        %p415 = scmp.lt.s32.totalorder %s414, 3
        %s416 = scalar_select %p415, %s414, 3
        %s417 = smul.addr %s416, 6
        %s418 = smul.addr %s417, 4
        %s419 = scalar_lea.vmem %s0, %s418
        %p420 = pneg %p46
        %p421 = pneg %p43
        %p422 = pneg %p67
        %p423 = pneg %p64
        %s424 = smul.u32 2, %s25
        %p425 = scmp.lt.s32.totalorder %s424, 3
        %s426 = scalar_select %p425, %s424, 3
        %s427 = smul.addr %s426, 4
        %s428 = scalar_lea.vmem %s2, %s427
        %p429 = pneg %p93
        %p430 = pneg %p90
        %s431 = sand.u32 %s106, 1
        %s432 = scalar_lea.sflag [#allocation4], %s431
        %s433 = sand.u32 %s106, 1
        %s434 = smul.addr %s433, 96
        %s435 = scalar_lea.vmem [#allocation3], %s434
        %p436 = pneg %p119
        %p437 = pneg %p116
        %s438 = sand.u32 %s25, 1
        %s439 = scalar_lea.sflag [#allocation6], %s438
        %s440 = sand.u32 %s132, 1
        %s441 = smul.addr %s440, 384
        %s442 = scalar_lea.vmem [#allocation5], %s441
        %p443 = pneg %p145
        %p444 = pneg %p142
        %s445 = smul.u32 2, %s25
        %p446 = scmp.lt.s32.totalorder %s445, 3
        %s447 = scalar_select %p446, %s445, 3
        %s448 = smul.addr %s447, 3
        %s449 = scalar_lea.vmem %s5, %s448
        %p450 = pneg %p171
        %p451 = pneg %p168
        %s452 = smul.u32 2, %s25
        %p453 = scmp.lt.s32.totalorder %s452, 3
        %s454 = scalar_select %p453, %s452, 3
        %s455 = smul.addr %s454, 3
        %s456 = scalar_lea.vmem %s6, %s455
        %p457 = pneg %p197
        %p458 = pneg %p194
        %s459 = sand.u32 %s25, 1
        %s460 = scalar_lea.sflag [#allocation6], %s459
        %s461 = sand.u32 %s210, 1
        %s462 = smul.addr %s461, 128
        %s463 = scalar_lea.vmem [#allocation7], %s462
        %p464 = pneg %p223
        %p465 = pneg %p220
        %p466 = pneg %p249
        %p467 = pneg %p246
        %s468 = smul.u32 2, %s25
        %p469 = scmp.lt.s32.totalorder %s468, 3
        %s470 = scalar_select %p469, %s468, 3
        %s471 = smul.addr %s470, 8
        %s472 = scalar_lea.vmem %s8, %s471
        %s473 = smul.u32 2, %s25
        %p474 = scmp.lt.s32.totalorder %s473, 3
        %s475 = scalar_select %p474, %s473, 3
        %s476 = smul.addr %s475, 6
        %s477 = smul.addr %s476, 4
        %s478 = scalar_lea.vmem %s0, %s477
        %s479 = smul.u32 2, %s25
        %s480 = smul.u32 2, %s25
        %p481 = scmp.lt.s32.totalorder %s480, 3
        %s482 = scalar_select %p481, %s480, 3
        %s483 = smul.addr %s482, 4
        %s484 = scalar_lea.vmem %s2, %s483
        %s485 = smul.u32 2, %s25
        %s486 = smul.u32 2, %s25
        %s487 = smul.u32 2, %s25
        %s488 = smul.u32 2, %s25
        %p489 = scmp.lt.s32.totalorder %s488, 3
        %s490 = scalar_select %p489, %s488, 3
        %s491 = smul.addr %s490, 3
        %s492 = scalar_lea.vmem %s5, %s491
        %s493 = smul.u32 2, %s25
        %s494 = smul.u32 2, %s25
        %p495 = scmp.lt.s32.totalorder %s494, 3
        %s496 = scalar_select %p495, %s494, 3
        %s497 = smul.addr %s496, 3
        %s498 = scalar_lea.vmem %s6, %s497
        %s499 = smul.u32 2, %s25
        %s500 = smul.u32 2, %s25
        %s501 = smul.u32 2, %s25
        %p502 = scmp.lt.s32.totalorder %s501, 3
        %s503 = scalar_select %p502, %s501, 3
        %s504 = smul.addr %s503, 8
        %s505 = scalar_lea.vmem %s8, %s504
        %s506 = smul.u32 2, %s25
        %v508 = vld [vmem:[%s478] sm:$0xf]
        %v509 = vld [vmem:[%s478 + $0x4] sm:$0xf]
        %v510 = vld [vmem:[%s478 + $0x8] sm:$0xf]
        %v511 = vld [vmem:[%s478 + $0xc] sm:$0xf]
        %v512 = vld [vmem:[%s478 + $0x10] sm:$0xf]
        %v513 = vld [vmem:[%s478 + $0x14] sm:$0xf]
        %v514 = vld [vmem:[%s478 + $0x18] sm:$0xf]
        %v515 = vld [vmem:[%s478 + $0x1c] sm:$0xf]
        %v516 = vld [vmem:[%s478 + $0x20] sm:$0xf]
        %v517 = vld [vmem:[%s478 + $0x24] sm:$0xf]
        %v518 = vld [vmem:[%s478 + $0x28] sm:$0xf]
        %v519 = vld [vmem:[%s478 + $0x2c] sm:$0xf]
        %v520 = vld [vmem:[%s1] sm:$0xf]
        %v521 = vld [vmem:[%s1 + $0x4] sm:$0xf]
        %v522 = vld [vmem:[%s1 + $0x8] sm:$0xf]
        %v535 = vunpack.c.l.b16 %v508
        %v536 = vunpack.c.l.b16 %v509
        %v537 = vunpack.c.l.b16 %v510
        %v538 = vunpack.c.l.b16 %v511
        %v539 = vunpack.c.l.b16 %v512
        %v540 = vunpack.c.l.b16 %v513
        %v541 = vunpack.c.l.b16 %v514
        %v542 = vunpack.c.l.b16 %v515
        %v543 = vunpack.c.l.b16 %v516
        %v544 = vunpack.c.l.b16 %v517
        %v545 = vunpack.c.l.b16 %v518
        %v546 = vunpack.c.l.b16 %v519
        %v547 = vpack.c.b16 %v536, %v535
        %v548 = vpack.c.b16 %v538, %v537
        %v549 = vpack.c.b16 %v540, %v539
        %v550 = vpack.c.b16 %v542, %v541
        %v551 = vpack.c.b16 %v544, %v543
        %v552 = vpack.c.b16 %v546, %v545
        %v556 = vunpack.c.l.b16 %v520
        %v557 = vunpack.c.l.b16 %v521
        %v558 = vunpack.c.l.b16 %v522
        %v559 = vpack.c.b16 %v557, %v556
        %v560 = vpack.c.b16 %v558, %v558
        %vm562 = vcmask 195584
        %v564 = vsel %vm562, %v547, 0
        %v567 = vsel %vm562, %v548, 0
        %v570 = vsel %vm562, %v549, 0
        %v573 = vsel %vm562, %v550, 0
        %v576 = vsel %vm562, %v551, 0
        %v579 = vsel %vm562, %v552, 0
        %vm581 = vcmask 1043456
        %v583 = vsel %vm581, %v560, 0
        %585 = vmatpush.bf16.msra.mxu0 0
        %586 = vmatpush.bf16.msra.mxu0 0
        %587 = vmatpush.bf16.msra.mxu0 0
        %588 = vmatpush.bf16.msra.mxu0 0
        %589 = vmatpush.bf16.msra.mxu0 0
        %590 = vmatpush.bf16.msra.mxu0 0
        %591 = vmatpush.bf16.msra.mxu0 %v583
        %592 = vmatpush.bf16.msra.mxu0 %v559
        %593 = vmatmul.bf16.gmra.mxu0 %v564
        %v594 = vpop.f32.mrf.mxu0
        %v595 = vadd.f32 0.0, %v594
        %v596 = vpop.f32.mrf.mxu0
        %v597 = vadd.f32 0.0, %v596
        %598 = vmatmul.bf16.gmra.mxu0 %v567
        %v599 = vpop.f32.mrf.mxu0
        %v600 = vadd.f32 0.0, %v599
        %v601 = vpop.f32.mrf.mxu0
        %v602 = vadd.f32 0.0, %v601
        %603 = vmatmul.bf16.gmra.mxu0 %v570
        %v604 = vpop.f32.mrf.mxu0
        %v605 = vadd.f32 0.0, %v604
        %v606 = vpop.f32.mrf.mxu0
        %v607 = vadd.f32 0.0, %v606
        %608 = vmatmul.bf16.gmra.mxu0 %v573
        %v609 = vpop.f32.mrf.mxu0
        %v610 = vadd.f32 0.0, %v609
        %v611 = vpop.f32.mrf.mxu0
        %v612 = vadd.f32 0.0, %v611
        %613 = vmatmul.bf16.gmra.mxu0 %v576
        %v614 = vpop.f32.mrf.mxu0
        %v615 = vadd.f32 0.0, %v614
        %v616 = vpop.f32.mrf.mxu0
        %v617 = vadd.f32 0.0, %v616
        %618 = vmatmul.bf16.gmra.mxu0 %v579
        %v619 = vpop.f32.mrf.mxu0
        %v620 = vadd.f32 0.0, %v619
        %v621 = vpop.f32.mrf.mxu0
        %v622 = vadd.f32 0.0, %v621
        %623 = vdwg.mxu0
        %v624 = vpack.c.bf16 %v597, %v595
        %v625 = vpack.c.bf16 %v602, %v600
        %v626 = vpack.c.bf16 %v607, %v605
        %v627 = vld [vmem:[%s388] sm:$0xff]
        %v628 = vld [vmem:[%s388 + $0x8] sm:$0xf]
        %v629 = vld [vmem:[%s388 + $0xc] sm:$0xff]
        %v630 = vld [vmem:[%s388 + $0x14] sm:$0xf]
        %v631 = vld [vmem:[%s388 + $0x18] sm:$0xff]
        %v632 = vld [vmem:[%s388 + $0x20] sm:$0xf]
        %v633 = vld [vmem:[%s388 + $0x24] sm:$0xff]
        %v634 = vld [vmem:[%s388 + $0x2c] sm:$0xf]
        %v635 = vld [vmem:[%s492] sm:$0x7]
        %v637 = vperm.slane %v635, 0
        %v638 = vperm.slane %v635, 1
        %v639 = vperm.slane %v635, 2
        %v651 = vunpack.c.l.b16 %v627
        %v652 = vunpack.c.h.b16 %v627
        %v653 = vunpack.c.l.b16 %v628
        %v654 = vunpack.c.l.b16 %v629
        %v655 = vunpack.c.h.b16 %v629
        %v656 = vunpack.c.l.b16 %v630
        %v657 = vunpack.c.l.b16 %v631
        %v658 = vunpack.c.h.b16 %v631
        %v659 = vunpack.c.l.b16 %v632
        %v660 = vunpack.c.l.b16 %v633
        %v661 = vunpack.c.h.b16 %v633
        %v662 = vunpack.c.l.b16 %v634
        %v663 = vpack.c.b16 %v654, %v651
        %v664 = vpack.c.b16 %v655, %v652
        %v665 = vpack.c.b16 %v656, %v653
        %v666 = vpack.c.b16 %v660, %v657
        %v667 = vpack.c.b16 %v661, %v658
        %v668 = vpack.c.b16 %v662, %v659
        %vm675 = vcmask 261120
        %v677 = vsel %vm675, %v624, 0
        %v680 = vsel %vm675, %v625, 0
        %v683 = vsel %vm675, %v626, 0
        %685 = vmatpush.bf16.msra.mxu0 0
        %686 = vmatpush.bf16.msra.mxu0 0
        %687 = vmatpush.bf16.msra.mxu0 0
        %688 = vmatpush.bf16.msra.mxu0 0
        %689 = vmatpush.bf16.msra.mxu0 0
        %690 = vmatpush.bf16.msra.mxu0 0
        %691 = vmatpush.bf16.msra.mxu0 %v666
        %692 = vmatpush.bf16.msra.mxu0 %v663
        %693 = vmatmul.bf16.gmra.mxu0 %v677
        %v694 = vpop.f32.mrf.mxu0
        %v695 = vadd.f32 %v637, %v694
        %v696 = vpop.f32.mrf.mxu0
        %v697 = vadd.f32 %v637, %v696
        %698 = vmatmul.bf16.gmra.mxu0 %v680
        %v699 = vpop.f32.mrf.mxu0
        %v700 = vadd.f32 %v637, %v699
        %v701 = vpop.f32.mrf.mxu0
        %v702 = vadd.f32 %v637, %v701
        %703 = vmatmul.bf16.gmra.mxu0 %v683
        %v704 = vpop.f32.mrf.mxu0
        %v705 = vadd.f32 %v637, %v704
        %v706 = vpop.f32.mrf.mxu0
        %v707 = vadd.f32 %v637, %v706
        %708 = vdwg.mxu0
        %709 = vmatpush.bf16.msra.mxu0 0
        %710 = vmatpush.bf16.msra.mxu0 0
        %711 = vmatpush.bf16.msra.mxu0 0
        %712 = vmatpush.bf16.msra.mxu0 0
        %713 = vmatpush.bf16.msra.mxu0 0
        %714 = vmatpush.bf16.msra.mxu0 0
        %715 = vmatpush.bf16.msra.mxu0 %v667
        %716 = vmatpush.bf16.msra.mxu0 %v664
        %717 = vmatmul.bf16.gmra.mxu0 %v677
        %v718 = vpop.f32.mrf.mxu0
        %v719 = vadd.f32 %v638, %v718
        %v720 = vpop.f32.mrf.mxu0
        %v721 = vadd.f32 %v638, %v720
        %722 = vmatmul.bf16.gmra.mxu0 %v680
        %v723 = vpop.f32.mrf.mxu0
        %v724 = vadd.f32 %v638, %v723
        %v725 = vpop.f32.mrf.mxu0
        %v726 = vadd.f32 %v638, %v725
        %727 = vmatmul.bf16.gmra.mxu0 %v683
        %v728 = vpop.f32.mrf.mxu0
        %v729 = vadd.f32 %v638, %v728
        %v730 = vpop.f32.mrf.mxu0
        %v731 = vadd.f32 %v638, %v730
        %732 = vdwg.mxu0
        %733 = vmatpush.bf16.msra.mxu0 0
        %734 = vmatpush.bf16.msra.mxu0 0
        %735 = vmatpush.bf16.msra.mxu0 0
        %736 = vmatpush.bf16.msra.mxu0 0
        %737 = vmatpush.bf16.msra.mxu0 0
        %738 = vmatpush.bf16.msra.mxu0 0
        %739 = vmatpush.bf16.msra.mxu0 %v668
        %740 = vmatpush.bf16.msra.mxu0 %v665
        %741 = vmatmul.bf16.gmra.mxu0 %v677
        %v742 = vpop.f32.mrf.mxu0
        %v743 = vadd.f32 %v639, %v742
        %v744 = vpop.f32.mrf.mxu0
        %v745 = vadd.f32 %v639, %v744
        %746 = vmatmul.bf16.gmra.mxu0 %v680
        %v747 = vpop.f32.mrf.mxu0
        %v748 = vadd.f32 %v639, %v747
        %v749 = vpop.f32.mrf.mxu0
        %v750 = vadd.f32 %v639, %v749
        %751 = vmatmul.bf16.gmra.mxu0 %v683
        %v752 = vpop.f32.mrf.mxu0
        %v753 = vadd.f32 %v639, %v752
        %v754 = vpop.f32.mrf.mxu0
        %v755 = vadd.f32 %v639, %v754
        %756 = vdwg.mxu0
        %757 = vst [vmem:[#allocation2] sm:$0xff] %v695
        %758 = vst [vmem:[#allocation2 + $0x8] sm:$0xff] %v719
        %759 = vst [vmem:[#allocation2 + $0x10] sm:$0xff] %v743
        %760 = vst [vmem:[#allocation2 + $0x18] sm:$0xff] %v697
        %761 = vst [vmem:[#allocation2 + $0x20] sm:$0xff] %v721
        %762 = vst [vmem:[#allocation2 + $0x28] sm:$0xff] %v745
        %763 = vst [vmem:[#allocation2 + $0x30] sm:$0xff] %v700
        %764 = vst [vmem:[#allocation2 + $0x38] sm:$0xff] %v724
        %765 = vst [vmem:[#allocation2 + $0x40] sm:$0xff] %v748
        %766 = vst [vmem:[#allocation2 + $0x48] sm:$0xff] %v702
        %767 = vst [vmem:[#allocation2 + $0x50] sm:$0xff] %v726
        %768 = vst [vmem:[#allocation2 + $0x58] sm:$0xff] %v750
        %769 = vst [vmem:[#allocation2 + $0x60] sm:$0xff] %v705
        %770 = vst [vmem:[#allocation2 + $0x68] sm:$0xff] %v729
        %771 = vst [vmem:[#allocation2 + $0x70] sm:$0xff] %v753
        %772 = vst [vmem:[#allocation2 + $0x78] sm:$0xff] %v707
        %773 = vst [vmem:[#allocation2 + $0x80] sm:$0xff] %v731
        %774 = vst [vmem:[#allocation2 + $0x88] sm:$0xff] %v755
        %v775 = vld [vmem:[%s398] sm:$0xff]
        %v776 = vld [vmem:[%s398 + $0x8] sm:$0xf]
        %v777 = vld [vmem:[%s398 + $0xc] sm:$0xff]
        %v778 = vld [vmem:[%s398 + $0x14] sm:$0xf]
        %v779 = vld [vmem:[%s398 + $0x18] sm:$0xff]
        %v780 = vld [vmem:[%s398 + $0x20] sm:$0xf]
        %v781 = vld [vmem:[%s398 + $0x24] sm:$0xff]
        %v782 = vld [vmem:[%s398 + $0x2c] sm:$0xf]
        %v783 = vld [vmem:[%s398 + $0x30] sm:$0xff]
        %v784 = vld [vmem:[%s398 + $0x38] sm:$0xf]
        %v785 = vld [vmem:[%s398 + $0x3c] sm:$0xff]
        %v786 = vld [vmem:[%s398 + $0x44] sm:$0xf]
        %v787 = vld [vmem:[%s398 + $0x48] sm:$0xff]
        %v788 = vld [vmem:[%s398 + $0x50] sm:$0xf]
        %v789 = vld [vmem:[%s398 + $0x54] sm:$0xff]
        %v790 = vld [vmem:[%s398 + $0x5c] sm:$0xf]
        %v791 = vld [vmem:[%s398 + $0x60] sm:$0xff]
        %v792 = vld [vmem:[%s398 + $0x68] sm:$0xf]
        %v793 = vld [vmem:[%s398 + $0x6c] sm:$0xff]
        %v794 = vld [vmem:[%s398 + $0x74] sm:$0xf]
        %v795 = vld [vmem:[%s398 + $0x78] sm:$0xff]
        %v796 = vld [vmem:[%s398 + $0x80] sm:$0xf]
        %v797 = vld [vmem:[%s398 + $0x84] sm:$0xff]
        %v798 = vld [vmem:[%s398 + $0x8c] sm:$0xf]
        %v799 = vld [vmem:[%s398 + $0x90] sm:$0xff]
        %v800 = vld [vmem:[%s398 + $0x98] sm:$0xf]
        %v801 = vld [vmem:[%s398 + $0x9c] sm:$0xff]
        %v802 = vld [vmem:[%s398 + $0xa4] sm:$0xf]
        %v803 = vld [vmem:[%s398 + $0xa8] sm:$0xff]
        %v804 = vld [vmem:[%s398 + $0xb0] sm:$0xf]
        %v805 = vld [vmem:[%s398 + $0xb4] sm:$0xff]
        %v806 = vld [vmem:[%s398 + $0xbc] sm:$0xf]
        %v807 = vld [vmem:[%s498] sm:$0x7]
        %v808 = vld [vmem:[#allocation2] sm:$0xff]
        %v809 = vld [vmem:[#allocation2 + $0x8] sm:$0xff]
        %v810 = vld [vmem:[#allocation2 + $0x10] sm:$0xff]
        %v811 = vld [vmem:[#allocation2 + $0x18] sm:$0xff]
        %v812 = vld [vmem:[#allocation2 + $0x20] sm:$0xff]
        %v813 = vld [vmem:[#allocation2 + $0x28] sm:$0xff]
        %v815 = vperm.slane %v807, 0
        %v816 = vperm.slane %v807, 1
        %v817 = vperm.slane %v807, 2
        %v853 = vunpack.c.l.b16 %v775
        %v854 = vunpack.c.h.b16 %v775
        %v855 = vunpack.c.l.b16 %v776
        %v856 = vunpack.c.l.b16 %v777
        %v857 = vunpack.c.h.b16 %v777
        %v858 = vunpack.c.l.b16 %v778
        %v859 = vunpack.c.l.b16 %v779
        %v860 = vunpack.c.h.b16 %v779
        %v861 = vunpack.c.l.b16 %v780
        %v862 = vunpack.c.l.b16 %v781
        %v863 = vunpack.c.h.b16 %v781
        %v864 = vunpack.c.l.b16 %v782
        %v865 = vunpack.c.l.b16 %v783
        %v866 = vunpack.c.h.b16 %v783
        %v867 = vunpack.c.l.b16 %v784
        %v868 = vunpack.c.l.b16 %v785
        %v869 = vunpack.c.h.b16 %v785
        %v870 = vunpack.c.l.b16 %v786
        %v871 = vunpack.c.l.b16 %v787
        %v872 = vunpack.c.h.b16 %v787
        %v873 = vunpack.c.l.b16 %v788
        %v874 = vunpack.c.l.b16 %v789
        %v875 = vunpack.c.h.b16 %v789
        %v876 = vunpack.c.l.b16 %v790
        %v877 = vunpack.c.l.b16 %v791
        %v878 = vunpack.c.h.b16 %v791
        %v879 = vunpack.c.l.b16 %v792
        %v880 = vunpack.c.l.b16 %v793
        %v881 = vunpack.c.h.b16 %v793
        %v882 = vunpack.c.l.b16 %v794
        %v883 = vunpack.c.l.b16 %v795
        %v884 = vunpack.c.h.b16 %v795
        %v885 = vunpack.c.l.b16 %v796
        %v886 = vunpack.c.l.b16 %v797
        %v887 = vunpack.c.h.b16 %v797
        %v888 = vunpack.c.l.b16 %v798
        %v889 = vunpack.c.l.b16 %v799
        %v890 = vunpack.c.h.b16 %v799
        %v891 = vunpack.c.l.b16 %v800
        %v892 = vunpack.c.l.b16 %v801
        %v893 = vunpack.c.h.b16 %v801
        %v894 = vunpack.c.l.b16 %v802
        %v895 = vunpack.c.l.b16 %v803
        %v896 = vunpack.c.h.b16 %v803
        %v897 = vunpack.c.l.b16 %v804
        %v898 = vunpack.c.l.b16 %v805
        %v899 = vunpack.c.h.b16 %v805
        %v900 = vunpack.c.l.b16 %v806
        %v901 = vpack.c.b16 %v856, %v853
        %v902 = vpack.c.b16 %v857, %v854
        %v903 = vpack.c.b16 %v858, %v855
        %v904 = vpack.c.b16 %v862, %v859
        %v905 = vpack.c.b16 %v863, %v860
        %v906 = vpack.c.b16 %v864, %v861
        %v907 = vpack.c.b16 %v868, %v865
        %v908 = vpack.c.b16 %v869, %v866
        %v909 = vpack.c.b16 %v870, %v867
        %v910 = vpack.c.b16 %v874, %v871
        %v911 = vpack.c.b16 %v875, %v872
        %v912 = vpack.c.b16 %v876, %v873
        %v913 = vpack.c.b16 %v880, %v877
        %v914 = vpack.c.b16 %v881, %v878
        %v915 = vpack.c.b16 %v882, %v879
        %v916 = vpack.c.b16 %v886, %v883
        %v917 = vpack.c.b16 %v887, %v884
        %v918 = vpack.c.b16 %v888, %v885
        %v919 = vpack.c.b16 %v892, %v889
        %v920 = vpack.c.b16 %v893, %v890
        %v921 = vpack.c.b16 %v894, %v891
        %v922 = vpack.c.b16 %v898, %v895
        %v923 = vpack.c.b16 %v899, %v896
        %v924 = vpack.c.b16 %v900, %v897
        %949 = vmatpush.bf16.msra.mxu0 %v922
        %950 = vmatpush.bf16.msra.mxu0 %v919
        %951 = vmatpush.bf16.msra.mxu0 %v916
        %952 = vmatpush.bf16.msra.mxu0 %v913
        %953 = vmatpush.bf16.msra.mxu0 %v910
        %954 = vmatpush.bf16.msra.mxu0 %v907
        %955 = vmatpush.bf16.msra.mxu0 %v904
        %956 = vmatpush.bf16.msra.mxu0 %v901
        %957 = vmatmul.bf16.gmra.mxu0 0
        %v958 = vpop.f32.mrf.mxu0
        %v959 = vadd.f32 %v815, %v958
        %v960 = vpop.f32.mrf.mxu0
        %v961 = vadd.f32 %v815, %v960
        %962 = vdwg.mxu0
        %963 = vmatpush.bf16.msra.mxu0 %v923
        %964 = vmatpush.bf16.msra.mxu0 %v920
        %965 = vmatpush.bf16.msra.mxu0 %v917
        %966 = vmatpush.bf16.msra.mxu0 %v914
        %967 = vmatpush.bf16.msra.mxu0 %v911
        %968 = vmatpush.bf16.msra.mxu0 %v908
        %969 = vmatpush.bf16.msra.mxu0 %v905
        %970 = vmatpush.bf16.msra.mxu0 %v902
        %971 = vmatmul.bf16.gmra.mxu0 0
        %v972 = vpop.f32.mrf.mxu0
        %v973 = vadd.f32 %v816, %v972
        %v974 = vpop.f32.mrf.mxu0
        %v975 = vadd.f32 %v816, %v974
        %976 = vdwg.mxu0
        %977 = vmatpush.bf16.msra.mxu0 %v924
        %978 = vmatpush.bf16.msra.mxu0 %v921
        %979 = vmatpush.bf16.msra.mxu0 %v918
        %980 = vmatpush.bf16.msra.mxu0 %v915
        %981 = vmatpush.bf16.msra.mxu0 %v912
        %982 = vmatpush.bf16.msra.mxu0 %v909
        %983 = vmatpush.bf16.msra.mxu0 %v906
        %984 = vmatpush.bf16.msra.mxu0 %v903
        %985 = vmatmul.bf16.gmra.mxu0 0
        %v986 = vpop.f32.mrf.mxu0
        %v987 = vadd.f32 %v817, %v986
        %v988 = vpop.f32.mrf.mxu0
        %v989 = vadd.f32 %v817, %v988
        %990 = vdwg.mxu0
        %v991 = vadd.f32 %v808, %v959
        %v992 = vadd.f32 %v811, %v961
        %v993 = vxor.u32 %v991, 2147483648
        %v994 = vxor.u32 %v992, 2147483648
        %v995 = vmul.f32 %v993, 1.442695
        %v996 = vpow.pop %v995
        %v997 = vmul.f32 %v994, 1.442695
        %v998 = vpow.pop %v997
        %v999 = vadd.f32 %v996, 1.0
        %v1000 = vadd.f32 %v998, 1.0
        %v1001 = vrcp.pop %v999
        %v1002 = vmul.f32 %v999, %v1001
        %v1003 = vsub.f32 1.0, %v1002
        %v1004 = vmul.f32 %v1001, %v1003
        %v1005 = vadd.f32 %v1001, %v1004
        %vm1006 = vweird.f32 %v999
        %vm1007 = vweird.f32 %v1001
        %vm1008 = vmor %vm1006, %vm1007
        %v1009 = vsel %vm1008, %v1001, %v1005
        %v1010 = vand.u32 2147483647, %v999
        %vm1011 = vcmp.eq.f32.partialorder %v1010, 8.507059e+37
        %v1012 = vand.u32 %v999, 2147483648
        %v1013 = vor.u32 1.1754944e-38, %v1012
        %v1014 = vsel %vm1011, %v1013, %v1009
        %v1015 = vmul.f32 1.0, %v1014
        %v1016 = vrcp.pop %v1000
        %v1017 = vmul.f32 %v1000, %v1016
        %v1018 = vsub.f32 1.0, %v1017
        %v1019 = vmul.f32 %v1016, %v1018
        %v1020 = vadd.f32 %v1016, %v1019
        %vm1021 = vweird.f32 %v1000
        %vm1022 = vweird.f32 %v1016
        %vm1023 = vmor %vm1021, %vm1022
        %v1024 = vsel %vm1023, %v1016, %v1020
        %v1025 = vand.u32 2147483647, %v1000
        %vm1026 = vcmp.eq.f32.partialorder %v1025, 8.507059e+37
        %v1027 = vand.u32 %v1000, 2147483648
        %v1028 = vor.u32 1.1754944e-38, %v1027
        %v1029 = vsel %vm1026, %v1028, %v1024
        %v1030 = vmul.f32 1.0, %v1029
        %v1031 = vadd.f32 %v809, %v973
        %v1032 = vadd.f32 %v812, %v975
        %v1033 = vxor.u32 %v1031, 2147483648
        %v1034 = vxor.u32 %v1032, 2147483648
        %v1035 = vmul.f32 %v1033, 1.442695
        %v1036 = vpow.pop %v1035
        %v1037 = vmul.f32 %v1034, 1.442695
        %v1038 = vpow.pop %v1037
        %v1039 = vadd.f32 %v1036, 1.0
        %v1040 = vadd.f32 %v1038, 1.0
        %v1041 = vrcp.pop %v1039
        %v1042 = vmul.f32 %v1039, %v1041
        %v1043 = vsub.f32 1.0, %v1042
        %v1044 = vmul.f32 %v1041, %v1043
        %v1045 = vadd.f32 %v1041, %v1044
        %vm1046 = vweird.f32 %v1039
        %vm1047 = vweird.f32 %v1041
        %vm1048 = vmor %vm1046, %vm1047
        %v1049 = vsel %vm1048, %v1041, %v1045
        %v1050 = vand.u32 2147483647, %v1039
        %vm1051 = vcmp.eq.f32.partialorder %v1050, 8.507059e+37
        %v1052 = vand.u32 %v1039, 2147483648
        %v1053 = vor.u32 1.1754944e-38, %v1052
        %v1054 = vsel %vm1051, %v1053, %v1049
        %v1055 = vmul.f32 1.0, %v1054
        %v1056 = vrcp.pop %v1040
        %v1057 = vmul.f32 %v1040, %v1056
        %v1058 = vsub.f32 1.0, %v1057
        %v1059 = vmul.f32 %v1056, %v1058
        %v1060 = vadd.f32 %v1056, %v1059
        %vm1061 = vweird.f32 %v1040
        %vm1062 = vweird.f32 %v1056
        %vm1063 = vmor %vm1061, %vm1062
        %v1064 = vsel %vm1063, %v1056, %v1060
        %v1065 = vand.u32 2147483647, %v1040
        %vm1066 = vcmp.eq.f32.partialorder %v1065, 8.507059e+37
        %v1067 = vand.u32 %v1040, 2147483648
        %v1068 = vor.u32 1.1754944e-38, %v1067
        %v1069 = vsel %vm1066, %v1068, %v1064
        %v1070 = vmul.f32 1.0, %v1069
        %v1071 = vmul.f32 %v1015, %v987
        %v1072 = vmul.f32 %v1030, %v989
        %v1073 = vadd.f32 %v810, %v1071
        %v1074 = vadd.f32 %v813, %v1072
        %v1075 = vtanh.pop %v1073
        %v1076 = vtanh.pop %v1074
        %v1077 = vsub.f32 1.0, %v1055
        %v1078 = vsub.f32 1.0, %v1070
        %v1079 = vmul.f32 %v1077, %v1075
        %v1080 = vmul.f32 %v1078, %v1076
        %v1081 = vmul.f32 %v1055, 0.0
        %v1082 = vmul.f32 %v1070, 0.0
        %v1083 = vadd.f32 %v1079, %v1081
        %v1084 = vadd.f32 %v1080, %v1082
        %v1085 = vld [vmem:[#allocation2 + $0x30] sm:$0xff]
        %v1086 = vld [vmem:[#allocation2 + $0x38] sm:$0xff]
        %v1087 = vld [vmem:[#allocation2 + $0x40] sm:$0xff]
        %v1088 = vld [vmem:[#allocation2 + $0x48] sm:$0xff]
        %v1089 = vld [vmem:[#allocation2 + $0x50] sm:$0xff]
        %v1090 = vld [vmem:[#allocation2 + $0x58] sm:$0xff]
        %v1091 = vpack.c.bf16 %v1084, %v1083
        %1092 = vmatpush.bf16.msra.mxu0 %v922
        %1093 = vmatpush.bf16.msra.mxu0 %v919
        %1094 = vmatpush.bf16.msra.mxu0 %v916
        %1095 = vmatpush.bf16.msra.mxu0 %v913
        %1096 = vmatpush.bf16.msra.mxu0 %v910
        %1097 = vmatpush.bf16.msra.mxu0 %v907
        %1098 = vmatpush.bf16.msra.mxu0 %v904
        %1099 = vmatpush.bf16.msra.mxu0 %v901
        %1100 = vmatmul.bf16.gmra.mxu0 %v1091
        %v1101 = vpop.f32.mrf.mxu0
        %v1102 = vadd.f32 %v815, %v1101
        %v1103 = vpop.f32.mrf.mxu0
        %v1104 = vadd.f32 %v815, %v1103
        %1105 = vdwg.mxu0
        %1106 = vmatpush.bf16.msra.mxu0 %v923
        %1107 = vmatpush.bf16.msra.mxu0 %v920
        %1108 = vmatpush.bf16.msra.mxu0 %v917
        %1109 = vmatpush.bf16.msra.mxu0 %v914
        %1110 = vmatpush.bf16.msra.mxu0 %v911
        %1111 = vmatpush.bf16.msra.mxu0 %v908
        %1112 = vmatpush.bf16.msra.mxu0 %v905
        %1113 = vmatpush.bf16.msra.mxu0 %v902
        %1114 = vmatmul.bf16.gmra.mxu0 %v1091
        %v1115 = vpop.f32.mrf.mxu0
        %v1116 = vadd.f32 %v816, %v1115
        %v1117 = vpop.f32.mrf.mxu0
        %v1118 = vadd.f32 %v816, %v1117
        %1119 = vdwg.mxu0
        %1120 = vmatpush.bf16.msra.mxu0 %v924
        %1121 = vmatpush.bf16.msra.mxu0 %v921
        %1122 = vmatpush.bf16.msra.mxu0 %v918
        %1123 = vmatpush.bf16.msra.mxu0 %v915
        %1124 = vmatpush.bf16.msra.mxu0 %v912
        %1125 = vmatpush.bf16.msra.mxu0 %v909
        %1126 = vmatpush.bf16.msra.mxu0 %v906
        %1127 = vmatpush.bf16.msra.mxu0 %v903
        %1128 = vmatmul.bf16.gmra.mxu0 %v1091
        %v1129 = vpop.f32.mrf.mxu0
        %v1130 = vadd.f32 %v817, %v1129
        %v1131 = vpop.f32.mrf.mxu0
        %v1132 = vadd.f32 %v817, %v1131
        %1133 = vdwg.mxu0
        %v1134 = vadd.f32 %v1085, %v1102
        %v1135 = vadd.f32 %v1088, %v1104
        %v1136 = vxor.u32 %v1134, 2147483648
        %v1137 = vxor.u32 %v1135, 2147483648
        %v1138 = vmul.f32 %v1136, 1.442695
        %v1139 = vpow.pop %v1138
        %v1140 = vmul.f32 %v1137, 1.442695
        %v1141 = vpow.pop %v1140
        %v1142 = vadd.f32 %v1139, 1.0
        %v1143 = vadd.f32 %v1141, 1.0
        %v1144 = vrcp.pop %v1142
        %v1145 = vmul.f32 %v1142, %v1144
        %v1146 = vsub.f32 1.0, %v1145
        %v1147 = vmul.f32 %v1144, %v1146
        %v1148 = vadd.f32 %v1144, %v1147
        %vm1149 = vweird.f32 %v1142
        %vm1150 = vweird.f32 %v1144
        %vm1151 = vmor %vm1149, %vm1150
        %v1152 = vsel %vm1151, %v1144, %v1148
        %v1153 = vand.u32 2147483647, %v1142
        %vm1154 = vcmp.eq.f32.partialorder %v1153, 8.507059e+37
        %v1155 = vand.u32 %v1142, 2147483648
        %v1156 = vor.u32 1.1754944e-38, %v1155
        %v1157 = vsel %vm1154, %v1156, %v1152
        %v1158 = vmul.f32 1.0, %v1157
        %v1159 = vrcp.pop %v1143
        %v1160 = vmul.f32 %v1143, %v1159
        %v1161 = vsub.f32 1.0, %v1160
        %v1162 = vmul.f32 %v1159, %v1161
        %v1163 = vadd.f32 %v1159, %v1162
        %vm1164 = vweird.f32 %v1143
        %vm1165 = vweird.f32 %v1159
        %vm1166 = vmor %vm1164, %vm1165
        %v1167 = vsel %vm1166, %v1159, %v1163
        %v1168 = vand.u32 2147483647, %v1143
        %vm1169 = vcmp.eq.f32.partialorder %v1168, 8.507059e+37
        %v1170 = vand.u32 %v1143, 2147483648
        %v1171 = vor.u32 1.1754944e-38, %v1170
        %v1172 = vsel %vm1169, %v1171, %v1167
        %v1173 = vmul.f32 1.0, %v1172
        %v1174 = vadd.f32 %v1086, %v1116
        %v1175 = vadd.f32 %v1089, %v1118
        %v1176 = vxor.u32 %v1174, 2147483648
        %v1177 = vxor.u32 %v1175, 2147483648
        %v1178 = vmul.f32 %v1176, 1.442695
        %v1179 = vpow.pop %v1178
        %v1180 = vmul.f32 %v1177, 1.442695
        %v1181 = vpow.pop %v1180
        %v1182 = vadd.f32 %v1179, 1.0
        %v1183 = vadd.f32 %v1181, 1.0
        %v1184 = vrcp.pop %v1182
        %v1185 = vmul.f32 %v1182, %v1184
        %v1186 = vsub.f32 1.0, %v1185
        %v1187 = vmul.f32 %v1184, %v1186
        %v1188 = vadd.f32 %v1184, %v1187
        %vm1189 = vweird.f32 %v1182
        %vm1190 = vweird.f32 %v1184
        %vm1191 = vmor %vm1189, %vm1190
        %v1192 = vsel %vm1191, %v1184, %v1188
        %v1193 = vand.u32 2147483647, %v1182
        %vm1194 = vcmp.eq.f32.partialorder %v1193, 8.507059e+37
        %v1195 = vand.u32 %v1182, 2147483648
        %v1196 = vor.u32 1.1754944e-38, %v1195
        %v1197 = vsel %vm1194, %v1196, %v1192
        %v1198 = vmul.f32 1.0, %v1197
        %v1199 = vrcp.pop %v1183
        %v1200 = vmul.f32 %v1183, %v1199
        %v1201 = vsub.f32 1.0, %v1200
        %v1202 = vmul.f32 %v1199, %v1201
        %v1203 = vadd.f32 %v1199, %v1202
        %vm1204 = vweird.f32 %v1183
        %vm1205 = vweird.f32 %v1199
        %vm1206 = vmor %vm1204, %vm1205
        %v1207 = vsel %vm1206, %v1199, %v1203
        %v1208 = vand.u32 2147483647, %v1183
        %vm1209 = vcmp.eq.f32.partialorder %v1208, 8.507059e+37
        %v1210 = vand.u32 %v1183, 2147483648
        %v1211 = vor.u32 1.1754944e-38, %v1210
        %v1212 = vsel %vm1209, %v1211, %v1207
        %v1213 = vmul.f32 1.0, %v1212
        %v1214 = vmul.f32 %v1158, %v1130
        %v1215 = vmul.f32 %v1173, %v1132
        %v1216 = vadd.f32 %v1087, %v1214
        %v1217 = vadd.f32 %v1090, %v1215
        %v1218 = vtanh.pop %v1216
        %v1219 = vtanh.pop %v1217
        %v1220 = vsub.f32 1.0, %v1198
        %v1221 = vsub.f32 1.0, %v1213
        %v1222 = vmul.f32 %v1220, %v1218
        %v1223 = vmul.f32 %v1221, %v1219
        %v1224 = vmul.f32 %v1198, %v1083
        %v1225 = vmul.f32 %v1213, %v1084
        %v1226 = vadd.f32 %v1222, %v1224
        %v1227 = vadd.f32 %v1223, %v1225
        %v1228 = vld [vmem:[#allocation2 + $0x60] sm:$0xff]
        %v1229 = vld [vmem:[#allocation2 + $0x68] sm:$0xff]
        %v1230 = vld [vmem:[#allocation2 + $0x70] sm:$0xff]
        %v1231 = vld [vmem:[#allocation2 + $0x78] sm:$0xff]
        %v1232 = vld [vmem:[#allocation2 + $0x80] sm:$0xff]
        %v1233 = vld [vmem:[#allocation2 + $0x88] sm:$0xff]
        %v1234 = vpack.c.bf16 %v1227, %v1226
        %1235 = vmatpush.bf16.msra.mxu0 %v922
        %1236 = vmatpush.bf16.msra.mxu0 %v919
        %1237 = vmatpush.bf16.msra.mxu0 %v916
        %1238 = vmatpush.bf16.msra.mxu0 %v913
        %1239 = vmatpush.bf16.msra.mxu0 %v910
        %1240 = vmatpush.bf16.msra.mxu0 %v907
        %1241 = vmatpush.bf16.msra.mxu0 %v904
        %1242 = vmatpush.bf16.msra.mxu0 %v901
        %1243 = vmatmul.bf16.gmra.mxu0 %v1234
        %v1244 = vpop.f32.mrf.mxu0
        %v1245 = vadd.f32 %v815, %v1244
        %v1246 = vpop.f32.mrf.mxu0
        %v1247 = vadd.f32 %v815, %v1246
        %1248 = vdwg.mxu0
        %1249 = vmatpush.bf16.msra.mxu0 %v923
        %1250 = vmatpush.bf16.msra.mxu0 %v920
        %1251 = vmatpush.bf16.msra.mxu0 %v917
        %1252 = vmatpush.bf16.msra.mxu0 %v914
        %1253 = vmatpush.bf16.msra.mxu0 %v911
        %1254 = vmatpush.bf16.msra.mxu0 %v908
        %1255 = vmatpush.bf16.msra.mxu0 %v905
        %1256 = vmatpush.bf16.msra.mxu0 %v902
        %1257 = vmatmul.bf16.gmra.mxu0 %v1234
        %v1258 = vpop.f32.mrf.mxu0
        %v1259 = vadd.f32 %v816, %v1258
        %v1260 = vpop.f32.mrf.mxu0
        %v1261 = vadd.f32 %v816, %v1260
        %1262 = vdwg.mxu0
        %1263 = vmatpush.bf16.msra.mxu0 %v924
        %1264 = vmatpush.bf16.msra.mxu0 %v921
        %1265 = vmatpush.bf16.msra.mxu0 %v918
        %1266 = vmatpush.bf16.msra.mxu0 %v915
        %1267 = vmatpush.bf16.msra.mxu0 %v912
        %1268 = vmatpush.bf16.msra.mxu0 %v909
        %1269 = vmatpush.bf16.msra.mxu0 %v906
        %1270 = vmatpush.bf16.msra.mxu0 %v903
        %1271 = vmatmul.bf16.gmra.mxu0 %v1234
        %v1272 = vpop.f32.mrf.mxu0
        %v1273 = vadd.f32 %v817, %v1272
        %v1274 = vpop.f32.mrf.mxu0
        %v1275 = vadd.f32 %v817, %v1274
        %1276 = vdwg.mxu0
        %v1277 = vadd.f32 %v1228, %v1245
        %v1278 = vadd.f32 %v1231, %v1247
        %v1279 = vxor.u32 %v1277, 2147483648
        %v1280 = vxor.u32 %v1278, 2147483648
        %v1281 = vmul.f32 %v1279, 1.442695
        %v1282 = vpow.pop %v1281
        %v1283 = vmul.f32 %v1280, 1.442695
        %v1284 = vpow.pop %v1283
        %v1285 = vadd.f32 %v1282, 1.0
        %v1286 = vadd.f32 %v1284, 1.0
        %v1287 = vrcp.pop %v1285
        %v1288 = vmul.f32 %v1285, %v1287
        %v1289 = vsub.f32 1.0, %v1288
        %v1290 = vmul.f32 %v1287, %v1289
        %v1291 = vadd.f32 %v1287, %v1290
        %vm1292 = vweird.f32 %v1285
        %vm1293 = vweird.f32 %v1287
        %vm1294 = vmor %vm1292, %vm1293
        %v1295 = vsel %vm1294, %v1287, %v1291
        %v1296 = vand.u32 2147483647, %v1285
        %vm1297 = vcmp.eq.f32.partialorder %v1296, 8.507059e+37
        %v1298 = vand.u32 %v1285, 2147483648
        %v1299 = vor.u32 1.1754944e-38, %v1298
        %v1300 = vsel %vm1297, %v1299, %v1295
        %v1301 = vmul.f32 1.0, %v1300
        %v1302 = vrcp.pop %v1286
        %v1303 = vmul.f32 %v1286, %v1302
        %v1304 = vsub.f32 1.0, %v1303
        %v1305 = vmul.f32 %v1302, %v1304
        %v1306 = vadd.f32 %v1302, %v1305
        %vm1307 = vweird.f32 %v1286
        %vm1308 = vweird.f32 %v1302
        %vm1309 = vmor %vm1307, %vm1308
        %v1310 = vsel %vm1309, %v1302, %v1306
        %v1311 = vand.u32 2147483647, %v1286
        %vm1312 = vcmp.eq.f32.partialorder %v1311, 8.507059e+37
        %v1313 = vand.u32 %v1286, 2147483648
        %v1314 = vor.u32 1.1754944e-38, %v1313
        %v1315 = vsel %vm1312, %v1314, %v1310
        %v1316 = vmul.f32 1.0, %v1315
        %v1317 = vadd.f32 %v1229, %v1259
        %v1318 = vadd.f32 %v1232, %v1261
        %v1319 = vxor.u32 %v1317, 2147483648
        %v1320 = vxor.u32 %v1318, 2147483648
        %v1321 = vmul.f32 %v1319, 1.442695
        %v1322 = vpow.pop %v1321
        %v1323 = vmul.f32 %v1320, 1.442695
        %v1324 = vpow.pop %v1323
        %v1325 = vadd.f32 %v1322, 1.0
        %v1326 = vadd.f32 %v1324, 1.0
        %v1327 = vrcp.pop %v1325
        %v1328 = vmul.f32 %v1325, %v1327
        %v1329 = vsub.f32 1.0, %v1328
        %v1330 = vmul.f32 %v1327, %v1329
        %v1331 = vadd.f32 %v1327, %v1330
        %vm1332 = vweird.f32 %v1325
        %vm1333 = vweird.f32 %v1327
        %vm1334 = vmor %vm1332, %vm1333
        %v1335 = vsel %vm1334, %v1327, %v1331
        %v1336 = vand.u32 2147483647, %v1325
        %vm1337 = vcmp.eq.f32.partialorder %v1336, 8.507059e+37
        %v1338 = vand.u32 %v1325, 2147483648
        %v1339 = vor.u32 1.1754944e-38, %v1338
        %v1340 = vsel %vm1337, %v1339, %v1335
        %v1341 = vmul.f32 1.0, %v1340
        %v1342 = vrcp.pop %v1326
        %v1343 = vmul.f32 %v1326, %v1342
        %v1344 = vsub.f32 1.0, %v1343
        %v1345 = vmul.f32 %v1342, %v1344
        %v1346 = vadd.f32 %v1342, %v1345
        %vm1347 = vweird.f32 %v1326
        %vm1348 = vweird.f32 %v1342
        %vm1349 = vmor %vm1347, %vm1348
        %v1350 = vsel %vm1349, %v1342, %v1346
        %v1351 = vand.u32 2147483647, %v1326
        %vm1352 = vcmp.eq.f32.partialorder %v1351, 8.507059e+37
        %v1353 = vand.u32 %v1326, 2147483648
        %v1354 = vor.u32 1.1754944e-38, %v1353
        %v1355 = vsel %vm1352, %v1354, %v1350
        %v1356 = vmul.f32 1.0, %v1355
        %v1357 = vmul.f32 %v1301, %v1273
        %v1358 = vmul.f32 %v1316, %v1275
        %v1359 = vadd.f32 %v1230, %v1357
        %v1360 = vadd.f32 %v1233, %v1358
        %v1361 = vtanh.pop %v1359
        %v1362 = vtanh.pop %v1360
        %v1363 = vsub.f32 1.0, %v1341
        %v1364 = vsub.f32 1.0, %v1356
        %v1365 = vmul.f32 %v1363, %v1361
        %v1366 = vmul.f32 %v1364, %v1362
        %v1367 = vmul.f32 %v1341, %v1226
        %v1368 = vmul.f32 %v1356, %v1227
        %v1369 = vadd.f32 %v1365, %v1367
        %v1370 = vadd.f32 %v1366, %v1368
        %v1371 = vpack.c.bf16 %v1370, %v1369
        %v1372 = vld [vmem:[%s408] sm:$0xf]
        %v1373 = vld [vmem:[%s408 + $0x4] sm:$0xf]
        %v1374 = vld [vmem:[%s408 + $0x8] sm:$0xf]
        %v1375 = vld [vmem:[%s408 + $0xc] sm:$0xf]
        %v1376 = vld [vmem:[%s408 + $0x10] sm:$0xf]
        %v1377 = vld [vmem:[%s408 + $0x14] sm:$0xf]
        %v1378 = vld [vmem:[%s408 + $0x18] sm:$0xf]
        %v1379 = vld [vmem:[%s408 + $0x1c] sm:$0xf]
        %v1380 = vld [vmem:[%s408 + $0x20] sm:$0xf]
        %v1381 = vld [vmem:[%s408 + $0x24] sm:$0xf]
        %v1382 = vld [vmem:[%s408 + $0x28] sm:$0xf]
        %v1383 = vld [vmem:[%s408 + $0x2c] sm:$0xf]
        %v1384 = vld [vmem:[%s408 + $0x30] sm:$0xf]
        %v1385 = vld [vmem:[%s408 + $0x34] sm:$0xf]
        %v1386 = vld [vmem:[%s408 + $0x38] sm:$0xf]
        %v1387 = vld [vmem:[%s408 + $0x3c] sm:$0xf]
        %v1404 = vunpack.c.l.b16 %v1372
        %v1405 = vunpack.c.l.b16 %v1373
        %v1406 = vunpack.c.l.b16 %v1374
        %v1407 = vunpack.c.l.b16 %v1375
        %v1408 = vunpack.c.l.b16 %v1376
        %v1409 = vunpack.c.l.b16 %v1377
        %v1410 = vunpack.c.l.b16 %v1378
        %v1411 = vunpack.c.l.b16 %v1379
        %v1412 = vunpack.c.l.b16 %v1380
        %v1413 = vunpack.c.l.b16 %v1381
        %v1414 = vunpack.c.l.b16 %v1382
        %v1415 = vunpack.c.l.b16 %v1383
        %v1416 = vunpack.c.l.b16 %v1384
        %v1417 = vunpack.c.l.b16 %v1385
        %v1418 = vunpack.c.l.b16 %v1386
        %v1419 = vunpack.c.l.b16 %v1387
        %v1420 = vpack.c.b16 %v1405, %v1404
        %v1421 = vpack.c.b16 %v1407, %v1406
        %v1422 = vpack.c.b16 %v1409, %v1408
        %v1423 = vpack.c.b16 %v1411, %v1410
        %v1424 = vpack.c.b16 %v1413, %v1412
        %v1425 = vpack.c.b16 %v1415, %v1414
        %v1426 = vpack.c.b16 %v1417, %v1416
        %v1427 = vpack.c.b16 %v1419, %v1418
        %1436 = vmatpush.bf16.msra.mxu0 %v1427
        %1437 = vmatpush.bf16.msra.mxu0 %v1426
        %1438 = vmatpush.bf16.msra.mxu0 %v1425
        %1439 = vmatpush.bf16.msra.mxu0 %v1424
        %1440 = vmatpush.bf16.msra.mxu0 %v1423
        %1441 = vmatpush.bf16.msra.mxu0 %v1422
        %1442 = vmatpush.bf16.msra.mxu0 %v1421
        %1443 = vmatpush.bf16.msra.mxu0 %v1420
        %1444 = vmatmul.bf16.gmra.mxu0 %v1371
        %v1445 = vpop.f32.mrf.mxu0
        %v1446 = vadd.f32 0.0, %v1445
        %v1447 = vpop.f32.mrf.mxu0
        %v1448 = vadd.f32 0.0, %v1447
        %1449 = vdwg.mxu0
        %vm1450 = vcmp.ge.f32.partialorder %v1446, 0.0
        %vm1451 = vcmp.ge.f32.partialorder %v1448, 0.0
        %v1452 = vmul.f32 %v1446, 0.01
        %v1453 = vmul.f32 %v1448, 0.01
        %v1454 = vsel %vm1450, %v1446, %v1452
        %v1455 = vsel %vm1451, %v1448, %v1453
        %v1456 = vmax.f32 %v1454, %v1455
        %1457 = vmax.xlane.f32.xlu0 %v1456
        %v1458 = vpop.xlane.xlu0 %1457
        %v1459 = vrot.slane %v1458, 4
        %v1460 = vmax.f32 %v1458, %v1459
        %v1461 = vrot.slane %v1460, 2
        %v1462 = vmax.f32 %v1460, %v1461
        %v1463 = vrot.slane %v1462, 1
        %v1464 = vmax.f32 %v1462, %v1463
        %s1465 = vtos %v1464
        %v1466 = vstv %s1465
        %v1467 = vsub.f32 %v1454, %v1466
        %v1468 = vsub.f32 %v1455, %v1466
        %v1469 = vmul.f32 %v1467, 1.442695
        %v1470 = vpow.pop %v1469
        %v1471 = vmul.f32 %v1468, 1.442695
        %v1472 = vpow.pop %v1471
        %v1473 = vld [vmem:[%s484] sm:$0xf]
        %v1474 = vmul.f32 %v1369, %v1470
        %v1475 = vmul.f32 %v1370, %v1472
        %v1476 = vpack.c.bf16 %v1475, %v1474
        %vm1477 = vcmask 130048
        %v1479 = vsel %vm1477, %v1473, 0
        %1481 = vmatpush.bf16.msra.mxu0 0
        %1482 = vmatpush.bf16.msra.mxu0 0
        %1483 = vmatpush.bf16.msra.mxu0 0
        %1484 = vmatpush.bf16.msra.mxu0 0
        %1485 = vmatpush.bf16.msra.mxu0 0
        %1486 = vmatpush.bf16.msra.mxu0 0
        %1487 = vmatpush.bf16.msra.mxu0 0
        %1488 = vmatpush.bf16.msra.mxu0 %v1476
        %1489 = vmatmul.bf16.gmra.mxu0 %v1479
        %v1490 = vpop.f32.mrf.mxu0
        %v1491 = vadd.f32 0.0, %v1490
        %v1492 = vpop.f32.mrf.mxu0
        %1493 = vdwg.mxu0
        %v1494 = vpack.c.bf16 %v1472, %v1470
        %1495 = vmatpush.bf16.msra.mxu0 0
        %1496 = vmatpush.bf16.msra.mxu0 0
        %1497 = vmatpush.bf16.msra.mxu0 0
        %1498 = vmatpush.bf16.msra.mxu0 0
        %1499 = vmatpush.bf16.msra.mxu0 0
        %1500 = vmatpush.bf16.msra.mxu0 0
        %1501 = vmatpush.bf16.msra.mxu0 0
        %1502 = vmatpush.bf16.msra.mxu0 %v1494
        %1503 = vmatmul.bf16.gmra.mxu0 %v1479
        %v1504 = vpop.f32.mrf.mxu0
        %v1505 = vadd.f32 0.0, %v1504
        %v1506 = vpop.f32.mrf.mxu0
        %1507 = vdwg.mxu0
        %vm1508 = vcmp.gt.f32.partialorder %v1505, 0.0
        %v1509 = vsel %vm1508, %v1505, 1.0
        %v1510 = vrcp.pop %v1509
        %v1511 = vmul.f32 %v1491, %v1510
        %v1512 = vsel %vm1508, %v1511, 0.0
        %vm1513 = vcmp.gt.f32.partialorder %v1512, 0.0
        %v1514 = vmin.f32 %v1512, 0.0
        %v1515 = vmul.f32 %v1514, 1.442695
        %v1516 = vpow.pop %v1515
        %v1517 = vsub.f32 %v1516, 1.0
        %v1518 = vsel %vm1513, %v1512, %v1517
        %1519 = vst [vmem:[%s505] sm:$0xff] %v1518
        %v1520 = vpack.c.bf16 %v612, %v610
        %v1521 = vpack.c.bf16 %v617, %v615
        %v1522 = vpack.c.bf16 %v622, %v620
        %s1523 = scalar_lea.vmem %s388, 48 [#allocation3]
        %v1524 = vld [vmem:[%s1523] sm:$0xff]
        %v1525 = vld [vmem:[%s1523 + $0x8] sm:$0xf]
        %v1526 = vld [vmem:[%s1523 + $0xc] sm:$0xff]
        %v1527 = vld [vmem:[%s1523 + $0x14] sm:$0xf]
        %v1528 = vld [vmem:[%s1523 + $0x18] sm:$0xff]
        %v1529 = vld [vmem:[%s1523 + $0x20] sm:$0xf]
        %v1530 = vld [vmem:[%s1523 + $0x24] sm:$0xff]
        %v1531 = vld [vmem:[%s1523 + $0x2c] sm:$0xf]
        %s1532 = scalar_lea.vmem %s492, 3
        %v1533 = vld [vmem:[%s1532] sm:$0x7]
        %v1535 = vperm.slane %v1533, 0
        %v1536 = vperm.slane %v1533, 1
        %v1537 = vperm.slane %v1533, 2
        %v1549 = vunpack.c.l.b16 %v1524
        %v1550 = vunpack.c.h.b16 %v1524
        %v1551 = vunpack.c.l.b16 %v1525
        %v1552 = vunpack.c.l.b16 %v1526
        %v1553 = vunpack.c.h.b16 %v1526
        %v1554 = vunpack.c.l.b16 %v1527
        %v1555 = vunpack.c.l.b16 %v1528
        %v1556 = vunpack.c.h.b16 %v1528
        %v1557 = vunpack.c.l.b16 %v1529
        %v1558 = vunpack.c.l.b16 %v1530
        %v1559 = vunpack.c.h.b16 %v1530
        %v1560 = vunpack.c.l.b16 %v1531
        %v1561 = vpack.c.b16 %v1552, %v1549
        %v1562 = vpack.c.b16 %v1553, %v1550
        %v1563 = vpack.c.b16 %v1554, %v1551
        %v1564 = vpack.c.b16 %v1558, %v1555
        %v1565 = vpack.c.b16 %v1559, %v1556
        %v1566 = vpack.c.b16 %v1560, %v1557
        %v1574 = vsel %vm675, %v1520, 0
        %v1577 = vsel %vm675, %v1521, 0
        %v1580 = vsel %vm675, %v1522, 0
        %1582 = vmatpush.bf16.msra.mxu0 0
        %1583 = vmatpush.bf16.msra.mxu0 0
        %1584 = vmatpush.bf16.msra.mxu0 0
        %1585 = vmatpush.bf16.msra.mxu0 0
        %1586 = vmatpush.bf16.msra.mxu0 0
        %1587 = vmatpush.bf16.msra.mxu0 0
        %1588 = vmatpush.bf16.msra.mxu0 %v1564
        %1589 = vmatpush.bf16.msra.mxu0 %v1561
        %1590 = vmatmul.bf16.gmra.mxu0 %v1574
        %v1591 = vpop.f32.mrf.mxu0
        %v1592 = vadd.f32 %v1535, %v1591
        %v1593 = vpop.f32.mrf.mxu0
        %v1594 = vadd.f32 %v1535, %v1593
        %1595 = vmatmul.bf16.gmra.mxu0 %v1577
        %v1596 = vpop.f32.mrf.mxu0
        %v1597 = vadd.f32 %v1535, %v1596
        %v1598 = vpop.f32.mrf.mxu0
        %v1599 = vadd.f32 %v1535, %v1598
        %1600 = vmatmul.bf16.gmra.mxu0 %v1580
        %v1601 = vpop.f32.mrf.mxu0
        %v1602 = vadd.f32 %v1535, %v1601
        %v1603 = vpop.f32.mrf.mxu0
        %v1604 = vadd.f32 %v1535, %v1603
        %1605 = vdwg.mxu0
        %1606 = vmatpush.bf16.msra.mxu0 0
        %1607 = vmatpush.bf16.msra.mxu0 0
        %1608 = vmatpush.bf16.msra.mxu0 0
        %1609 = vmatpush.bf16.msra.mxu0 0
        %1610 = vmatpush.bf16.msra.mxu0 0
        %1611 = vmatpush.bf16.msra.mxu0 0
        %1612 = vmatpush.bf16.msra.mxu0 %v1565
        %1613 = vmatpush.bf16.msra.mxu0 %v1562
        %1614 = vmatmul.bf16.gmra.mxu0 %v1574
        %v1615 = vpop.f32.mrf.mxu0
        %v1616 = vadd.f32 %v1536, %v1615
        %v1617 = vpop.f32.mrf.mxu0
        %v1618 = vadd.f32 %v1536, %v1617
        %1619 = vmatmul.bf16.gmra.mxu0 %v1577
        %v1620 = vpop.f32.mrf.mxu0
        %v1621 = vadd.f32 %v1536, %v1620
        %v1622 = vpop.f32.mrf.mxu0
        %v1623 = vadd.f32 %v1536, %v1622
        %1624 = vmatmul.bf16.gmra.mxu0 %v1580
        %v1625 = vpop.f32.mrf.mxu0
        %v1626 = vadd.f32 %v1536, %v1625
        %v1627 = vpop.f32.mrf.mxu0
        %v1628 = vadd.f32 %v1536, %v1627
        %1629 = vdwg.mxu0
        %1630 = vmatpush.bf16.msra.mxu0 0
        %1631 = vmatpush.bf16.msra.mxu0 0
        %1632 = vmatpush.bf16.msra.mxu0 0
        %1633 = vmatpush.bf16.msra.mxu0 0
        %1634 = vmatpush.bf16.msra.mxu0 0
        %1635 = vmatpush.bf16.msra.mxu0 0
        %1636 = vmatpush.bf16.msra.mxu0 %v1566
        %1637 = vmatpush.bf16.msra.mxu0 %v1563
        %1638 = vmatmul.bf16.gmra.mxu0 %v1574
        %v1639 = vpop.f32.mrf.mxu0
        %v1640 = vadd.f32 %v1537, %v1639
        %v1641 = vpop.f32.mrf.mxu0
        %v1642 = vadd.f32 %v1537, %v1641
        %1643 = vmatmul.bf16.gmra.mxu0 %v1577
        %v1644 = vpop.f32.mrf.mxu0
        %v1645 = vadd.f32 %v1537, %v1644
        %v1646 = vpop.f32.mrf.mxu0
        %v1647 = vadd.f32 %v1537, %v1646
        %1648 = vmatmul.bf16.gmra.mxu0 %v1580
        %v1649 = vpop.f32.mrf.mxu0
        %v1650 = vadd.f32 %v1537, %v1649
        %v1651 = vpop.f32.mrf.mxu0
        %v1652 = vadd.f32 %v1537, %v1651
        %1653 = vdwg.mxu0
        %1654 = vst [vmem:[#allocation2] sm:$0xff] %v1592
        %1655 = vst [vmem:[#allocation2 + $0x8] sm:$0xff] %v1616
        %1656 = vst [vmem:[#allocation2 + $0x10] sm:$0xff] %v1640
        %1657 = vst [vmem:[#allocation2 + $0x18] sm:$0xff] %v1594
        %1658 = vst [vmem:[#allocation2 + $0x20] sm:$0xff] %v1618
        %1659 = vst [vmem:[#allocation2 + $0x28] sm:$0xff] %v1642
        %1660 = vst [vmem:[#allocation2 + $0x30] sm:$0xff] %v1597
        %1661 = vst [vmem:[#allocation2 + $0x38] sm:$0xff] %v1621
        %1662 = vst [vmem:[#allocation2 + $0x40] sm:$0xff] %v1645
        %1663 = vst [vmem:[#allocation2 + $0x48] sm:$0xff] %v1599
        %1664 = vst [vmem:[#allocation2 + $0x50] sm:$0xff] %v1623
        %1665 = vst [vmem:[#allocation2 + $0x58] sm:$0xff] %v1647
        %1666 = vst [vmem:[#allocation2 + $0x60] sm:$0xff] %v1602
        %1667 = vst [vmem:[#allocation2 + $0x68] sm:$0xff] %v1626
        %1668 = vst [vmem:[#allocation2 + $0x70] sm:$0xff] %v1650
        %1669 = vst [vmem:[#allocation2 + $0x78] sm:$0xff] %v1604
        %1670 = vst [vmem:[#allocation2 + $0x80] sm:$0xff] %v1628
        %1671 = vst [vmem:[#allocation2 + $0x88] sm:$0xff] %v1652
        %s1672 = scalar_lea.vmem %s398, 192 [#allocation5]
        %v1673 = vld [vmem:[%s1672] sm:$0xff]
        %v1674 = vld [vmem:[%s1672 + $0x8] sm:$0xf]
        %v1675 = vld [vmem:[%s1672 + $0xc] sm:$0xff]
        %v1676 = vld [vmem:[%s1672 + $0x14] sm:$0xf]
        %v1677 = vld [vmem:[%s1672 + $0x18] sm:$0xff]
        %v1678 = vld [vmem:[%s1672 + $0x20] sm:$0xf]
        %v1679 = vld [vmem:[%s1672 + $0x24] sm:$0xff]
        %v1680 = vld [vmem:[%s1672 + $0x2c] sm:$0xf]
        %v1681 = vld [vmem:[%s1672 + $0x30] sm:$0xff]
        %v1682 = vld [vmem:[%s1672 + $0x38] sm:$0xf]
        %v1683 = vld [vmem:[%s1672 + $0x3c] sm:$0xff]
        %v1684 = vld [vmem:[%s1672 + $0x44] sm:$0xf]
        %v1685 = vld [vmem:[%s1672 + $0x48] sm:$0xff]
        %v1686 = vld [vmem:[%s1672 + $0x50] sm:$0xf]
        %v1687 = vld [vmem:[%s1672 + $0x54] sm:$0xff]
        %v1688 = vld [vmem:[%s1672 + $0x5c] sm:$0xf]
        %v1689 = vld [vmem:[%s1672 + $0x60] sm:$0xff]
        %v1690 = vld [vmem:[%s1672 + $0x68] sm:$0xf]
        %v1691 = vld [vmem:[%s1672 + $0x6c] sm:$0xff]
        %v1692 = vld [vmem:[%s1672 + $0x74] sm:$0xf]
        %v1693 = vld [vmem:[%s1672 + $0x78] sm:$0xff]
        %v1694 = vld [vmem:[%s1672 + $0x80] sm:$0xf]
        %v1695 = vld [vmem:[%s1672 + $0x84] sm:$0xff]
        %v1696 = vld [vmem:[%s1672 + $0x8c] sm:$0xf]
        %v1697 = vld [vmem:[%s1672 + $0x90] sm:$0xff]
        %v1698 = vld [vmem:[%s1672 + $0x98] sm:$0xf]
        %v1699 = vld [vmem:[%s1672 + $0x9c] sm:$0xff]
        %v1700 = vld [vmem:[%s1672 + $0xa4] sm:$0xf]
        %v1701 = vld [vmem:[%s1672 + $0xa8] sm:$0xff]
        %v1702 = vld [vmem:[%s1672 + $0xb0] sm:$0xf]
        %v1703 = vld [vmem:[%s1672 + $0xb4] sm:$0xff]
        %v1704 = vld [vmem:[%s1672 + $0xbc] sm:$0xf]
        %s1705 = scalar_lea.vmem %s498, 3
        %v1706 = vld [vmem:[%s1705] sm:$0x7]
        %v1707 = vld [vmem:[#allocation2] sm:$0xff]
        %v1708 = vld [vmem:[#allocation2 + $0x8] sm:$0xff]
        %v1709 = vld [vmem:[#allocation2 + $0x10] sm:$0xff]
        %v1710 = vld [vmem:[#allocation2 + $0x18] sm:$0xff]
        %v1711 = vld [vmem:[#allocation2 + $0x20] sm:$0xff]
        %v1712 = vld [vmem:[#allocation2 + $0x28] sm:$0xff]
        %v1714 = vperm.slane %v1706, 0
        %v1715 = vperm.slane %v1706, 1
        %v1716 = vperm.slane %v1706, 2
        %v1752 = vunpack.c.l.b16 %v1673
        %v1753 = vunpack.c.h.b16 %v1673
        %v1754 = vunpack.c.l.b16 %v1674
        %v1755 = vunpack.c.l.b16 %v1675
        %v1756 = vunpack.c.h.b16 %v1675
        %v1757 = vunpack.c.l.b16 %v1676
        %v1758 = vunpack.c.l.b16 %v1677
        %v1759 = vunpack.c.h.b16 %v1677
        %v1760 = vunpack.c.l.b16 %v1678
        %v1761 = vunpack.c.l.b16 %v1679
        %v1762 = vunpack.c.h.b16 %v1679
        %v1763 = vunpack.c.l.b16 %v1680
        %v1764 = vunpack.c.l.b16 %v1681
        %v1765 = vunpack.c.h.b16 %v1681
        %v1766 = vunpack.c.l.b16 %v1682
        %v1767 = vunpack.c.l.b16 %v1683
        %v1768 = vunpack.c.h.b16 %v1683
        %v1769 = vunpack.c.l.b16 %v1684
        %v1770 = vunpack.c.l.b16 %v1685
        %v1771 = vunpack.c.h.b16 %v1685
        %v1772 = vunpack.c.l.b16 %v1686
        %v1773 = vunpack.c.l.b16 %v1687
        %v1774 = vunpack.c.h.b16 %v1687
        %v1775 = vunpack.c.l.b16 %v1688
        %v1776 = vunpack.c.l.b16 %v1689
        %v1777 = vunpack.c.h.b16 %v1689
        %v1778 = vunpack.c.l.b16 %v1690
        %v1779 = vunpack.c.l.b16 %v1691
        %v1780 = vunpack.c.h.b16 %v1691
        %v1781 = vunpack.c.l.b16 %v1692
        %v1782 = vunpack.c.l.b16 %v1693
        %v1783 = vunpack.c.h.b16 %v1693
        %v1784 = vunpack.c.l.b16 %v1694
        %v1785 = vunpack.c.l.b16 %v1695
        %v1786 = vunpack.c.h.b16 %v1695
        %v1787 = vunpack.c.l.b16 %v1696
        %v1788 = vunpack.c.l.b16 %v1697
        %v1789 = vunpack.c.h.b16 %v1697
        %v1790 = vunpack.c.l.b16 %v1698
        %v1791 = vunpack.c.l.b16 %v1699
        %v1792 = vunpack.c.h.b16 %v1699
        %v1793 = vunpack.c.l.b16 %v1700
        %v1794 = vunpack.c.l.b16 %v1701
        %v1795 = vunpack.c.h.b16 %v1701
        %v1796 = vunpack.c.l.b16 %v1702
        %v1797 = vunpack.c.l.b16 %v1703
        %v1798 = vunpack.c.h.b16 %v1703
        %v1799 = vunpack.c.l.b16 %v1704
        %v1800 = vpack.c.b16 %v1755, %v1752
        %v1801 = vpack.c.b16 %v1756, %v1753
        %v1802 = vpack.c.b16 %v1757, %v1754
        %v1803 = vpack.c.b16 %v1761, %v1758
        %v1804 = vpack.c.b16 %v1762, %v1759
        %v1805 = vpack.c.b16 %v1763, %v1760
        %v1806 = vpack.c.b16 %v1767, %v1764
        %v1807 = vpack.c.b16 %v1768, %v1765
        %v1808 = vpack.c.b16 %v1769, %v1766
        %v1809 = vpack.c.b16 %v1773, %v1770
        %v1810 = vpack.c.b16 %v1774, %v1771
        %v1811 = vpack.c.b16 %v1775, %v1772
        %v1812 = vpack.c.b16 %v1779, %v1776
        %v1813 = vpack.c.b16 %v1780, %v1777
        %v1814 = vpack.c.b16 %v1781, %v1778
        %v1815 = vpack.c.b16 %v1785, %v1782
        %v1816 = vpack.c.b16 %v1786, %v1783
        %v1817 = vpack.c.b16 %v1787, %v1784
        %v1818 = vpack.c.b16 %v1791, %v1788
        %v1819 = vpack.c.b16 %v1792, %v1789
        %v1820 = vpack.c.b16 %v1793, %v1790
        %v1821 = vpack.c.b16 %v1797, %v1794
        %v1822 = vpack.c.b16 %v1798, %v1795
        %v1823 = vpack.c.b16 %v1799, %v1796
        %1848 = vmatpush.bf16.msra.mxu0 %v1821
        %1849 = vmatpush.bf16.msra.mxu0 %v1818
        %1850 = vmatpush.bf16.msra.mxu0 %v1815
        %1851 = vmatpush.bf16.msra.mxu0 %v1812
        %1852 = vmatpush.bf16.msra.mxu0 %v1809
        %1853 = vmatpush.bf16.msra.mxu0 %v1806
        %1854 = vmatpush.bf16.msra.mxu0 %v1803
        %1855 = vmatpush.bf16.msra.mxu0 %v1800
        %1856 = vmatmul.bf16.gmra.mxu0 0
        %v1857 = vpop.f32.mrf.mxu0
        %v1858 = vadd.f32 %v1714, %v1857
        %v1859 = vpop.f32.mrf.mxu0
        %v1860 = vadd.f32 %v1714, %v1859
        %1861 = vdwg.mxu0
        %1862 = vmatpush.bf16.msra.mxu0 %v1822
        %1863 = vmatpush.bf16.msra.mxu0 %v1819
        %1864 = vmatpush.bf16.msra.mxu0 %v1816
        %1865 = vmatpush.bf16.msra.mxu0 %v1813
        %1866 = vmatpush.bf16.msra.mxu0 %v1810
        %1867 = vmatpush.bf16.msra.mxu0 %v1807
        %1868 = vmatpush.bf16.msra.mxu0 %v1804
        %1869 = vmatpush.bf16.msra.mxu0 %v1801
        %1870 = vmatmul.bf16.gmra.mxu0 0
        %v1871 = vpop.f32.mrf.mxu0
        %v1872 = vadd.f32 %v1715, %v1871
        %v1873 = vpop.f32.mrf.mxu0
        %v1874 = vadd.f32 %v1715, %v1873
        %1875 = vdwg.mxu0
        %1876 = vmatpush.bf16.msra.mxu0 %v1823
        %1877 = vmatpush.bf16.msra.mxu0 %v1820
        %1878 = vmatpush.bf16.msra.mxu0 %v1817
        %1879 = vmatpush.bf16.msra.mxu0 %v1814
        %1880 = vmatpush.bf16.msra.mxu0 %v1811
        %1881 = vmatpush.bf16.msra.mxu0 %v1808
        %1882 = vmatpush.bf16.msra.mxu0 %v1805
        %1883 = vmatpush.bf16.msra.mxu0 %v1802
        %1884 = vmatmul.bf16.gmra.mxu0 0
        %v1885 = vpop.f32.mrf.mxu0
        %v1886 = vadd.f32 %v1716, %v1885
        %v1887 = vpop.f32.mrf.mxu0
        %v1888 = vadd.f32 %v1716, %v1887
        %1889 = vdwg.mxu0
        %v1890 = vadd.f32 %v1707, %v1858
        %v1891 = vadd.f32 %v1710, %v1860
        %v1892 = vxor.u32 %v1890, 2147483648
        %v1893 = vxor.u32 %v1891, 2147483648
        %v1894 = vmul.f32 %v1892, 1.442695
        %v1895 = vpow.pop %v1894
        %v1896 = vmul.f32 %v1893, 1.442695
        %v1897 = vpow.pop %v1896
        %v1898 = vadd.f32 %v1895, 1.0
        %v1899 = vadd.f32 %v1897, 1.0
        %v1900 = vrcp.pop %v1898
        %v1901 = vmul.f32 %v1898, %v1900
        %v1902 = vsub.f32 1.0, %v1901
        %v1903 = vmul.f32 %v1900, %v1902
        %v1904 = vadd.f32 %v1900, %v1903
        %vm1905 = vweird.f32 %v1898
        %vm1906 = vweird.f32 %v1900
        %vm1907 = vmor %vm1905, %vm1906
        %v1908 = vsel %vm1907, %v1900, %v1904
        %v1909 = vand.u32 2147483647, %v1898
        %vm1910 = vcmp.eq.f32.partialorder %v1909, 8.507059e+37
        %v1911 = vand.u32 %v1898, 2147483648
        %v1912 = vor.u32 1.1754944e-38, %v1911
        %v1913 = vsel %vm1910, %v1912, %v1908
        %v1914 = vmul.f32 1.0, %v1913
        %v1915 = vrcp.pop %v1899
        %v1916 = vmul.f32 %v1899, %v1915
        %v1917 = vsub.f32 1.0, %v1916
        %v1918 = vmul.f32 %v1915, %v1917
        %v1919 = vadd.f32 %v1915, %v1918
        %vm1920 = vweird.f32 %v1899
        %vm1921 = vweird.f32 %v1915
        %vm1922 = vmor %vm1920, %vm1921
        %v1923 = vsel %vm1922, %v1915, %v1919
        %v1924 = vand.u32 2147483647, %v1899
        %vm1925 = vcmp.eq.f32.partialorder %v1924, 8.507059e+37
        %v1926 = vand.u32 %v1899, 2147483648
        %v1927 = vor.u32 1.1754944e-38, %v1926
        %v1928 = vsel %vm1925, %v1927, %v1923
        %v1929 = vmul.f32 1.0, %v1928
        %v1930 = vadd.f32 %v1708, %v1872
        %v1931 = vadd.f32 %v1711, %v1874
        %v1932 = vxor.u32 %v1930, 2147483648
        %v1933 = vxor.u32 %v1931, 2147483648
        %v1934 = vmul.f32 %v1932, 1.442695
        %v1935 = vpow.pop %v1934
        %v1936 = vmul.f32 %v1933, 1.442695
        %v1937 = vpow.pop %v1936
        %v1938 = vadd.f32 %v1935, 1.0
        %v1939 = vadd.f32 %v1937, 1.0
        %v1940 = vrcp.pop %v1938
        %v1941 = vmul.f32 %v1938, %v1940
        %v1942 = vsub.f32 1.0, %v1941
        %v1943 = vmul.f32 %v1940, %v1942
        %v1944 = vadd.f32 %v1940, %v1943
        %vm1945 = vweird.f32 %v1938
        %vm1946 = vweird.f32 %v1940
        %vm1947 = vmor %vm1945, %vm1946
        %v1948 = vsel %vm1947, %v1940, %v1944
        %v1949 = vand.u32 2147483647, %v1938
        %vm1950 = vcmp.eq.f32.partialorder %v1949, 8.507059e+37
        %v1951 = vand.u32 %v1938, 2147483648
        %v1952 = vor.u32 1.1754944e-38, %v1951
        %v1953 = vsel %vm1950, %v1952, %v1948
        %v1954 = vmul.f32 1.0, %v1953
        %v1955 = vrcp.pop %v1939
        %v1956 = vmul.f32 %v1939, %v1955
        %v1957 = vsub.f32 1.0, %v1956
        %v1958 = vmul.f32 %v1955, %v1957
        %v1959 = vadd.f32 %v1955, %v1958
        %vm1960 = vweird.f32 %v1939
        %vm1961 = vweird.f32 %v1955
        %vm1962 = vmor %vm1960, %vm1961
        %v1963 = vsel %vm1962, %v1955, %v1959
        %v1964 = vand.u32 2147483647, %v1939
        %vm1965 = vcmp.eq.f32.partialorder %v1964, 8.507059e+37
        %v1966 = vand.u32 %v1939, 2147483648
        %v1967 = vor.u32 1.1754944e-38, %v1966
        %v1968 = vsel %vm1965, %v1967, %v1963
        %v1969 = vmul.f32 1.0, %v1968
        %v1970 = vmul.f32 %v1914, %v1886
        %v1971 = vmul.f32 %v1929, %v1888
        %v1972 = vadd.f32 %v1709, %v1970
        %v1973 = vadd.f32 %v1712, %v1971
        %v1974 = vtanh.pop %v1972
        %v1975 = vtanh.pop %v1973
        %v1976 = vsub.f32 1.0, %v1954
        %v1977 = vsub.f32 1.0, %v1969
        %v1978 = vmul.f32 %v1976, %v1974
        %v1979 = vmul.f32 %v1977, %v1975
        %v1980 = vmul.f32 %v1954, 0.0
        %v1981 = vmul.f32 %v1969, 0.0
        %v1982 = vadd.f32 %v1978, %v1980
        %v1983 = vadd.f32 %v1979, %v1981
        %v1984 = vld [vmem:[#allocation2 + $0x30] sm:$0xff]
        %v1985 = vld [vmem:[#allocation2 + $0x38] sm:$0xff]
        %v1986 = vld [vmem:[#allocation2 + $0x40] sm:$0xff]
        %v1987 = vld [vmem:[#allocation2 + $0x48] sm:$0xff]
        %v1988 = vld [vmem:[#allocation2 + $0x50] sm:$0xff]
        %v1989 = vld [vmem:[#allocation2 + $0x58] sm:$0xff]
        %v1990 = vpack.c.bf16 %v1983, %v1982
        %1991 = vmatpush.bf16.msra.mxu0 %v1821
        %1992 = vmatpush.bf16.msra.mxu0 %v1818
        %1993 = vmatpush.bf16.msra.mxu0 %v1815
        %1994 = vmatpush.bf16.msra.mxu0 %v1812
        %1995 = vmatpush.bf16.msra.mxu0 %v1809
        %1996 = vmatpush.bf16.msra.mxu0 %v1806
        %1997 = vmatpush.bf16.msra.mxu0 %v1803
        %1998 = vmatpush.bf16.msra.mxu0 %v1800
        %1999 = vmatmul.bf16.gmra.mxu0 %v1990
        %v2000 = vpop.f32.mrf.mxu0
        %v2001 = vadd.f32 %v1714, %v2000
        %v2002 = vpop.f32.mrf.mxu0
        %v2003 = vadd.f32 %v1714, %v2002
        %2004 = vdwg.mxu0
        %2005 = vmatpush.bf16.msra.mxu0 %v1822
        %2006 = vmatpush.bf16.msra.mxu0 %v1819
        %2007 = vmatpush.bf16.msra.mxu0 %v1816
        %2008 = vmatpush.bf16.msra.mxu0 %v1813
        %2009 = vmatpush.bf16.msra.mxu0 %v1810
        %2010 = vmatpush.bf16.msra.mxu0 %v1807
        %2011 = vmatpush.bf16.msra.mxu0 %v1804
        %2012 = vmatpush.bf16.msra.mxu0 %v1801
        %2013 = vmatmul.bf16.gmra.mxu0 %v1990
        %v2014 = vpop.f32.mrf.mxu0
        %v2015 = vadd.f32 %v1715, %v2014
        %v2016 = vpop.f32.mrf.mxu0
        %v2017 = vadd.f32 %v1715, %v2016
        %2018 = vdwg.mxu0
        %2019 = vmatpush.bf16.msra.mxu0 %v1823
        %2020 = vmatpush.bf16.msra.mxu0 %v1820
        %2021 = vmatpush.bf16.msra.mxu0 %v1817
        %2022 = vmatpush.bf16.msra.mxu0 %v1814
        %2023 = vmatpush.bf16.msra.mxu0 %v1811
        %2024 = vmatpush.bf16.msra.mxu0 %v1808
        %2025 = vmatpush.bf16.msra.mxu0 %v1805
        %2026 = vmatpush.bf16.msra.mxu0 %v1802
        %2027 = vmatmul.bf16.gmra.mxu0 %v1990
        %v2028 = vpop.f32.mrf.mxu0
        %v2029 = vadd.f32 %v1716, %v2028
        %v2030 = vpop.f32.mrf.mxu0
        %v2031 = vadd.f32 %v1716, %v2030
        %2032 = vdwg.mxu0
        %v2033 = vadd.f32 %v1984, %v2001
        %v2034 = vadd.f32 %v1987, %v2003
        %v2035 = vxor.u32 %v2033, 2147483648
        %v2036 = vxor.u32 %v2034, 2147483648
        %v2037 = vmul.f32 %v2035, 1.442695
        %v2038 = vpow.pop %v2037
        %v2039 = vmul.f32 %v2036, 1.442695
        %v2040 = vpow.pop %v2039
        %v2041 = vadd.f32 %v2038, 1.0
        %v2042 = vadd.f32 %v2040, 1.0
        %v2043 = vrcp.pop %v2041
        %v2044 = vmul.f32 %v2041, %v2043
        %v2045 = vsub.f32 1.0, %v2044
        %v2046 = vmul.f32 %v2043, %v2045
        %v2047 = vadd.f32 %v2043, %v2046
        %vm2048 = vweird.f32 %v2041
        %vm2049 = vweird.f32 %v2043
        %vm2050 = vmor %vm2048, %vm2049
        %v2051 = vsel %vm2050, %v2043, %v2047
        %v2052 = vand.u32 2147483647, %v2041
        %vm2053 = vcmp.eq.f32.partialorder %v2052, 8.507059e+37
        %v2054 = vand.u32 %v2041, 2147483648
        %v2055 = vor.u32 1.1754944e-38, %v2054
        %v2056 = vsel %vm2053, %v2055, %v2051
        %v2057 = vmul.f32 1.0, %v2056
        %v2058 = vrcp.pop %v2042
        %v2059 = vmul.f32 %v2042, %v2058
        %v2060 = vsub.f32 1.0, %v2059
        %v2061 = vmul.f32 %v2058, %v2060
        %v2062 = vadd.f32 %v2058, %v2061
        %vm2063 = vweird.f32 %v2042
        %vm2064 = vweird.f32 %v2058
        %vm2065 = vmor %vm2063, %vm2064
        %v2066 = vsel %vm2065, %v2058, %v2062
        %v2067 = vand.u32 2147483647, %v2042
        %vm2068 = vcmp.eq.f32.partialorder %v2067, 8.507059e+37
        %v2069 = vand.u32 %v2042, 2147483648
        %v2070 = vor.u32 1.1754944e-38, %v2069
        %v2071 = vsel %vm2068, %v2070, %v2066
        %v2072 = vmul.f32 1.0, %v2071
        %v2073 = vadd.f32 %v1985, %v2015
        %v2074 = vadd.f32 %v1988, %v2017
        %v2075 = vxor.u32 %v2073, 2147483648
        %v2076 = vxor.u32 %v2074, 2147483648
        %v2077 = vmul.f32 %v2075, 1.442695
        %v2078 = vpow.pop %v2077
        %v2079 = vmul.f32 %v2076, 1.442695
        %v2080 = vpow.pop %v2079
        %v2081 = vadd.f32 %v2078, 1.0
        %v2082 = vadd.f32 %v2080, 1.0
        %v2083 = vrcp.pop %v2081
        %v2084 = vmul.f32 %v2081, %v2083
        %v2085 = vsub.f32 1.0, %v2084
        %v2086 = vmul.f32 %v2083, %v2085
        %v2087 = vadd.f32 %v2083, %v2086
        %vm2088 = vweird.f32 %v2081
        %vm2089 = vweird.f32 %v2083
        %vm2090 = vmor %vm2088, %vm2089
        %v2091 = vsel %vm2090, %v2083, %v2087
        %v2092 = vand.u32 2147483647, %v2081
        %vm2093 = vcmp.eq.f32.partialorder %v2092, 8.507059e+37
        %v2094 = vand.u32 %v2081, 2147483648
        %v2095 = vor.u32 1.1754944e-38, %v2094
        %v2096 = vsel %vm2093, %v2095, %v2091
        %v2097 = vmul.f32 1.0, %v2096
        %v2098 = vrcp.pop %v2082
        %v2099 = vmul.f32 %v2082, %v2098
        %v2100 = vsub.f32 1.0, %v2099
        %v2101 = vmul.f32 %v2098, %v2100
        %v2102 = vadd.f32 %v2098, %v2101
        %vm2103 = vweird.f32 %v2082
        %vm2104 = vweird.f32 %v2098
        %vm2105 = vmor %vm2103, %vm2104
        %v2106 = vsel %vm2105, %v2098, %v2102
        %v2107 = vand.u32 2147483647, %v2082
        %vm2108 = vcmp.eq.f32.partialorder %v2107, 8.507059e+37
        %v2109 = vand.u32 %v2082, 2147483648
        %v2110 = vor.u32 1.1754944e-38, %v2109
        %v2111 = vsel %vm2108, %v2110, %v2106
        %v2112 = vmul.f32 1.0, %v2111
        %v2113 = vmul.f32 %v2057, %v2029
        %v2114 = vmul.f32 %v2072, %v2031
        %v2115 = vadd.f32 %v1986, %v2113
        %v2116 = vadd.f32 %v1989, %v2114
        %v2117 = vtanh.pop %v2115
        %v2118 = vtanh.pop %v2116
        %v2119 = vsub.f32 1.0, %v2097
        %v2120 = vsub.f32 1.0, %v2112
        %v2121 = vmul.f32 %v2119, %v2117
        %v2122 = vmul.f32 %v2120, %v2118
        %v2123 = vmul.f32 %v2097, %v1982
        %v2124 = vmul.f32 %v2112, %v1983
        %v2125 = vadd.f32 %v2121, %v2123
        %v2126 = vadd.f32 %v2122, %v2124
        %v2127 = vld [vmem:[#allocation2 + $0x60] sm:$0xff]
        %v2128 = vld [vmem:[#allocation2 + $0x68] sm:$0xff]
        %v2129 = vld [vmem:[#allocation2 + $0x70] sm:$0xff]
        %v2130 = vld [vmem:[#allocation2 + $0x78] sm:$0xff]
        %v2131 = vld [vmem:[#allocation2 + $0x80] sm:$0xff]
        %v2132 = vld [vmem:[#allocation2 + $0x88] sm:$0xff]
        %v2133 = vpack.c.bf16 %v2126, %v2125
        %2134 = vmatpush.bf16.msra.mxu0 %v1821
        %2135 = vmatpush.bf16.msra.mxu0 %v1818
        %2136 = vmatpush.bf16.msra.mxu0 %v1815
        %2137 = vmatpush.bf16.msra.mxu0 %v1812
        %2138 = vmatpush.bf16.msra.mxu0 %v1809
        %2139 = vmatpush.bf16.msra.mxu0 %v1806
        %2140 = vmatpush.bf16.msra.mxu0 %v1803
        %2141 = vmatpush.bf16.msra.mxu0 %v1800
        %2142 = vmatmul.bf16.gmra.mxu0 %v2133
        %v2143 = vpop.f32.mrf.mxu0
        %v2144 = vadd.f32 %v1714, %v2143
        %v2145 = vpop.f32.mrf.mxu0
        %v2146 = vadd.f32 %v1714, %v2145
        %2147 = vdwg.mxu0
        %2148 = vmatpush.bf16.msra.mxu0 %v1822
        %2149 = vmatpush.bf16.msra.mxu0 %v1819
        %2150 = vmatpush.bf16.msra.mxu0 %v1816
        %2151 = vmatpush.bf16.msra.mxu0 %v1813
        %2152 = vmatpush.bf16.msra.mxu0 %v1810
        %2153 = vmatpush.bf16.msra.mxu0 %v1807
        %2154 = vmatpush.bf16.msra.mxu0 %v1804
        %2155 = vmatpush.bf16.msra.mxu0 %v1801
        %2156 = vmatmul.bf16.gmra.mxu0 %v2133
        %v2157 = vpop.f32.mrf.mxu0
        %v2158 = vadd.f32 %v1715, %v2157
        %v2159 = vpop.f32.mrf.mxu0
        %v2160 = vadd.f32 %v1715, %v2159
        %2161 = vdwg.mxu0
        %2162 = vmatpush.bf16.msra.mxu0 %v1823
        %2163 = vmatpush.bf16.msra.mxu0 %v1820
        %2164 = vmatpush.bf16.msra.mxu0 %v1817
        %2165 = vmatpush.bf16.msra.mxu0 %v1814
        %2166 = vmatpush.bf16.msra.mxu0 %v1811
        %2167 = vmatpush.bf16.msra.mxu0 %v1808
        %2168 = vmatpush.bf16.msra.mxu0 %v1805
        %2169 = vmatpush.bf16.msra.mxu0 %v1802
        %2170 = vmatmul.bf16.gmra.mxu0 %v2133
        %v2171 = vpop.f32.mrf.mxu0
        %v2172 = vadd.f32 %v1716, %v2171
        %v2173 = vpop.f32.mrf.mxu0
        %v2174 = vadd.f32 %v1716, %v2173
        %2175 = vdwg.mxu0
        %v2176 = vadd.f32 %v2127, %v2144
        %v2177 = vadd.f32 %v2130, %v2146
        %v2178 = vxor.u32 %v2176, 2147483648
        %v2179 = vxor.u32 %v2177, 2147483648
        %v2180 = vmul.f32 %v2178, 1.442695
        %v2181 = vpow.pop %v2180
        %v2182 = vmul.f32 %v2179, 1.442695
        %v2183 = vpow.pop %v2182
        %v2184 = vadd.f32 %v2181, 1.0
        %v2185 = vadd.f32 %v2183, 1.0
        %v2186 = vrcp.pop %v2184
        %v2187 = vmul.f32 %v2184, %v2186
        %v2188 = vsub.f32 1.0, %v2187
        %v2189 = vmul.f32 %v2186, %v2188
        %v2190 = vadd.f32 %v2186, %v2189
        %vm2191 = vweird.f32 %v2184
        %vm2192 = vweird.f32 %v2186
        %vm2193 = vmor %vm2191, %vm2192
        %v2194 = vsel %vm2193, %v2186, %v2190
        %v2195 = vand.u32 2147483647, %v2184
        %vm2196 = vcmp.eq.f32.partialorder %v2195, 8.507059e+37
        %v2197 = vand.u32 %v2184, 2147483648
        %v2198 = vor.u32 1.1754944e-38, %v2197
        %v2199 = vsel %vm2196, %v2198, %v2194
        %v2200 = vmul.f32 1.0, %v2199
        %v2201 = vrcp.pop %v2185
        %v2202 = vmul.f32 %v2185, %v2201
        %v2203 = vsub.f32 1.0, %v2202
        %v2204 = vmul.f32 %v2201, %v2203
        %v2205 = vadd.f32 %v2201, %v2204
        %vm2206 = vweird.f32 %v2185
        %vm2207 = vweird.f32 %v2201
        %vm2208 = vmor %vm2206, %vm2207
        %v2209 = vsel %vm2208, %v2201, %v2205
        %v2210 = vand.u32 2147483647, %v2185
        %vm2211 = vcmp.eq.f32.partialorder %v2210, 8.507059e+37
        %v2212 = vand.u32 %v2185, 2147483648
        %v2213 = vor.u32 1.1754944e-38, %v2212
        %v2214 = vsel %vm2211, %v2213, %v2209
        %v2215 = vmul.f32 1.0, %v2214
        %v2216 = vadd.f32 %v2128, %v2158
        %v2217 = vadd.f32 %v2131, %v2160
        %v2218 = vxor.u32 %v2216, 2147483648
        %v2219 = vxor.u32 %v2217, 2147483648
        %v2220 = vmul.f32 %v2218, 1.442695
        %v2221 = vpow.pop %v2220
        %v2222 = vmul.f32 %v2219, 1.442695
        %v2223 = vpow.pop %v2222
        %v2224 = vadd.f32 %v2221, 1.0
        %v2225 = vadd.f32 %v2223, 1.0
        %v2226 = vrcp.pop %v2224
        %v2227 = vmul.f32 %v2224, %v2226
        %v2228 = vsub.f32 1.0, %v2227
        %v2229 = vmul.f32 %v2226, %v2228
        %v2230 = vadd.f32 %v2226, %v2229
        %vm2231 = vweird.f32 %v2224
        %vm2232 = vweird.f32 %v2226
        %vm2233 = vmor %vm2231, %vm2232
        %v2234 = vsel %vm2233, %v2226, %v2230
        %v2235 = vand.u32 2147483647, %v2224
        %vm2236 = vcmp.eq.f32.partialorder %v2235, 8.507059e+37
        %v2237 = vand.u32 %v2224, 2147483648
        %v2238 = vor.u32 1.1754944e-38, %v2237
        %v2239 = vsel %vm2236, %v2238, %v2234
        %v2240 = vmul.f32 1.0, %v2239
        %v2241 = vrcp.pop %v2225
        %v2242 = vmul.f32 %v2225, %v2241
        %v2243 = vsub.f32 1.0, %v2242
        %v2244 = vmul.f32 %v2241, %v2243
        %v2245 = vadd.f32 %v2241, %v2244
        %vm2246 = vweird.f32 %v2225
        %vm2247 = vweird.f32 %v2241
        %vm2248 = vmor %vm2246, %vm2247
        %v2249 = vsel %vm2248, %v2241, %v2245
        %v2250 = vand.u32 2147483647, %v2225
        %vm2251 = vcmp.eq.f32.partialorder %v2250, 8.507059e+37
        %v2252 = vand.u32 %v2225, 2147483648
        %v2253 = vor.u32 1.1754944e-38, %v2252
        %v2254 = vsel %vm2251, %v2253, %v2249
        %v2255 = vmul.f32 1.0, %v2254
        %v2256 = vmul.f32 %v2200, %v2172
        %v2257 = vmul.f32 %v2215, %v2174
        %v2258 = vadd.f32 %v2129, %v2256
        %v2259 = vadd.f32 %v2132, %v2257
        %v2260 = vtanh.pop %v2258
        %v2261 = vtanh.pop %v2259
        %v2262 = vsub.f32 1.0, %v2240
        %v2263 = vsub.f32 1.0, %v2255
        %v2264 = vmul.f32 %v2262, %v2260
        %v2265 = vmul.f32 %v2263, %v2261
        %v2266 = vmul.f32 %v2240, %v2125
        %v2267 = vmul.f32 %v2255, %v2126
        %v2268 = vadd.f32 %v2264, %v2266
        %v2269 = vadd.f32 %v2265, %v2267
        %v2270 = vpack.c.bf16 %v2269, %v2268
        %s2271 = scalar_lea.vmem %s408, 64 [#allocation7]
        %v2272 = vld [vmem:[%s2271] sm:$0xf]
        %v2273 = vld [vmem:[%s2271 + $0x4] sm:$0xf]
        %v2274 = vld [vmem:[%s2271 + $0x8] sm:$0xf]
        %v2275 = vld [vmem:[%s2271 + $0xc] sm:$0xf]
        %v2276 = vld [vmem:[%s2271 + $0x10] sm:$0xf]
        %v2277 = vld [vmem:[%s2271 + $0x14] sm:$0xf]
        %v2278 = vld [vmem:[%s2271 + $0x18] sm:$0xf]
        %v2279 = vld [vmem:[%s2271 + $0x1c] sm:$0xf]
        %v2280 = vld [vmem:[%s2271 + $0x20] sm:$0xf]
        %v2281 = vld [vmem:[%s2271 + $0x24] sm:$0xf]
        %v2282 = vld [vmem:[%s2271 + $0x28] sm:$0xf]
        %v2283 = vld [vmem:[%s2271 + $0x2c] sm:$0xf]
        %v2284 = vld [vmem:[%s2271 + $0x30] sm:$0xf]
        %v2285 = vld [vmem:[%s2271 + $0x34] sm:$0xf]
        %v2286 = vld [vmem:[%s2271 + $0x38] sm:$0xf]
        %v2287 = vld [vmem:[%s2271 + $0x3c] sm:$0xf]
        %v2304 = vunpack.c.l.b16 %v2272
        %v2305 = vunpack.c.l.b16 %v2273
        %v2306 = vunpack.c.l.b16 %v2274
        %v2307 = vunpack.c.l.b16 %v2275
        %v2308 = vunpack.c.l.b16 %v2276
        %v2309 = vunpack.c.l.b16 %v2277
        %v2310 = vunpack.c.l.b16 %v2278
        %v2311 = vunpack.c.l.b16 %v2279
        %v2312 = vunpack.c.l.b16 %v2280
        %v2313 = vunpack.c.l.b16 %v2281
        %v2314 = vunpack.c.l.b16 %v2282
        %v2315 = vunpack.c.l.b16 %v2283
        %v2316 = vunpack.c.l.b16 %v2284
        %v2317 = vunpack.c.l.b16 %v2285
        %v2318 = vunpack.c.l.b16 %v2286
        %v2319 = vunpack.c.l.b16 %v2287
        %v2320 = vpack.c.b16 %v2305, %v2304
        %v2321 = vpack.c.b16 %v2307, %v2306
        %v2322 = vpack.c.b16 %v2309, %v2308
        %v2323 = vpack.c.b16 %v2311, %v2310
        %v2324 = vpack.c.b16 %v2313, %v2312
        %v2325 = vpack.c.b16 %v2315, %v2314
        %v2326 = vpack.c.b16 %v2317, %v2316
        %v2327 = vpack.c.b16 %v2319, %v2318
        %2336 = vmatpush.bf16.msra.mxu0 %v2327
        %2337 = vmatpush.bf16.msra.mxu0 %v2326
        %2338 = vmatpush.bf16.msra.mxu0 %v2325
        %2339 = vmatpush.bf16.msra.mxu0 %v2324
        %2340 = vmatpush.bf16.msra.mxu0 %v2323
        %2341 = vmatpush.bf16.msra.mxu0 %v2322
        %2342 = vmatpush.bf16.msra.mxu0 %v2321
        %2343 = vmatpush.bf16.msra.mxu0 %v2320
        %2344 = vmatmul.bf16.gmra.mxu0 %v2270
        %v2345 = vpop.f32.mrf.mxu0
        %v2346 = vadd.f32 0.0, %v2345
        %v2347 = vpop.f32.mrf.mxu0
        %v2348 = vadd.f32 0.0, %v2347
        %2349 = vdwg.mxu0
        %vm2350 = vcmp.ge.f32.partialorder %v2346, 0.0
        %vm2351 = vcmp.ge.f32.partialorder %v2348, 0.0
        %v2352 = vmul.f32 %v2346, 0.01
        %v2353 = vmul.f32 %v2348, 0.01
        %v2354 = vsel %vm2350, %v2346, %v2352
        %v2355 = vsel %vm2351, %v2348, %v2353
        %v2356 = vmax.f32 %v2354, %v2355
        %2357 = vmax.xlane.f32.xlu0 %v2356
        %v2358 = vpop.xlane.xlu0 %2357
        %v2359 = vrot.slane %v2358, 4
        %v2360 = vmax.f32 %v2358, %v2359
        %v2361 = vrot.slane %v2360, 2
        %v2362 = vmax.f32 %v2360, %v2361
        %v2363 = vrot.slane %v2362, 1
        %v2364 = vmax.f32 %v2362, %v2363
        %s2365 = vtos %v2364
        %v2366 = vstv %s2365
        %v2367 = vsub.f32 %v2354, %v2366
        %v2368 = vsub.f32 %v2355, %v2366
        %v2369 = vmul.f32 %v2367, 1.442695
        %v2370 = vpow.pop %v2369
        %v2371 = vmul.f32 %v2368, 1.442695
        %v2372 = vpow.pop %v2371
        %s2373 = scalar_lea.vmem %s484, 4
        %v2374 = vld [vmem:[%s2373] sm:$0xf]
        %v2375 = vmul.f32 %v2268, %v2370
        %v2376 = vmul.f32 %v2269, %v2372
        %v2377 = vpack.c.bf16 %v2376, %v2375
        %v2379 = vsel %vm1477, %v2374, 0
        %2381 = vmatpush.bf16.msra.mxu0 0
        %2382 = vmatpush.bf16.msra.mxu0 0
        %2383 = vmatpush.bf16.msra.mxu0 0
        %2384 = vmatpush.bf16.msra.mxu0 0
        %2385 = vmatpush.bf16.msra.mxu0 0
        %2386 = vmatpush.bf16.msra.mxu0 0
        %2387 = vmatpush.bf16.msra.mxu0 0
        %2388 = vmatpush.bf16.msra.mxu0 %v2377
        %2389 = vmatmul.bf16.gmra.mxu0 %v2379
        %v2390 = vpop.f32.mrf.mxu0
        %v2391 = vadd.f32 0.0, %v2390
        %v2392 = vpop.f32.mrf.mxu0
        %2393 = vdwg.mxu0
        %v2394 = vpack.c.bf16 %v2372, %v2370
        %2395 = vmatpush.bf16.msra.mxu0 0
        %2396 = vmatpush.bf16.msra.mxu0 0
        %2397 = vmatpush.bf16.msra.mxu0 0
        %2398 = vmatpush.bf16.msra.mxu0 0
        %2399 = vmatpush.bf16.msra.mxu0 0
        %2400 = vmatpush.bf16.msra.mxu0 0
        %2401 = vmatpush.bf16.msra.mxu0 0
        %2402 = vmatpush.bf16.msra.mxu0 %v2394
        %2403 = vmatmul.bf16.gmra.mxu0 %v2379
        %v2404 = vpop.f32.mrf.mxu0
        %v2405 = vadd.f32 0.0, %v2404
        %v2406 = vpop.f32.mrf.mxu0
        %2407 = vdwg.mxu0
        %vm2408 = vcmp.gt.f32.partialorder %v2405, 0.0
        %v2409 = vsel %vm2408, %v2405, 1.0
        %v2410 = vrcp.pop %v2409
        %v2411 = vmul.f32 %v2391, %v2410
        %v2412 = vsel %vm2408, %v2411, 0.0
        %vm2413 = vcmp.gt.f32.partialorder %v2412, 0.0
        %v2414 = vmin.f32 %v2412, 0.0
        %v2415 = vmul.f32 %v2414, 1.442695
        %v2416 = vpow.pop %v2415
        %v2417 = vsub.f32 %v2416, 1.0
        %v2418 = vsel %vm2413, %v2412, %v2417
        %s2419 = scalar_lea.vmem %s505, 8
        %2420 = vst [vmem:[%s2419] sm:$0xff] %v2418
        %s2421 = smul.u32 2, %s25
        %p2422 = scmp.lt.s32.totalorder %s2421, 3
        %s2423 = scalar_select %p2422, %s2421, 3
        %s2424 = smul.addr %s2423, 8
        %s2425 = scalar_lea.vmem %s8, %s2424
        // Predicated region
        $region65: #{magnn_lp_forward.1} parent=51 // pred_check
          %p2426 = pneg %p246
        $region66: #{magnn_lp_forward.1} parent=51 // pred_check_branch
          %2428 = sbr.rel (%p2426) target = $region68
        $region67: #{magnn_lp_forward.1} parent=51 // pred_region
          %s2429 = smul.u32 2, %s25
        $region68: #{magnn_lp_forward.1} parent=51 // pred_fallthru
          _
      $region52: #{magnn_lp_forward.1} parent=5 // pred_fallthru
        _
      %p2430 = scmp.le.s32.totalorder 2, %s20
      // Predicated region
      $region69: #{magnn_lp_forward.1} parent=5 // pred_check
        %p2431 = pneg %p2430
      $region70: #{magnn_lp_forward.1} parent=5 // pred_check_branch
        %2433 = sbr.rel (%p2431) target = $region72
      $region71: #{magnn_lp_forward.1} parent=5 // pred_region
        %s2434 = ssub.s32 %s20, 2
        // Predicated region
        $region73: #{magnn_lp_forward.1} parent=71 // pred_check
          %p2435 = pneg %p252
        $region74: #{magnn_lp_forward.1} parent=71 // pred_check_branch
          %2437 = sbr.rel (%p2435) target = $region76
        $region75: #{magnn_lp_forward.1} parent=71 // pred_region
          %s2438 = smul.u32 2, %s26
          %p2439 = scmp.lt.s32.totalorder %s2438, 3
          %s2440 = scalar_select %p2439, %s2438, 3
          %s2441 = smul.addr %s2440, 8
          %s2442 = scalar_lea.vmem %s8, %s2441
        $region76: #{magnn_lp_forward.1} parent=71 // pred_fallthru
          _
      $region72: #{magnn_lp_forward.1} parent=5 // pred_fallthru
        _
    $region6: #{magnn_lp_forward.1} parent=1 // loop_footer
      %s24 = sadd.s32 1, %s20
    $region7: #{magnn_lp_forward.1} parent=1 // loop_footer_branch
      %19 = sbr.rel target = $region3
    $region8: #{magnn_lp_forward.1} parent=1 // loop_exit
      _
    %2443 = vsyncpa [#allocation4], 1
    %s2444 = scalar_lea.sflag [#allocation4], 1
    %2445 = vsyncpa %s2444, 1
    %2446 = vsyncpa [#allocation6], 1
    %s2447 = scalar_lea.sflag [#allocation6], 1
    %2448 = vsyncpa %s2447, 1

</llo_original>
